<compile_context>
chip_gen: v7x
topology: tpu7x:2x2x1
jax: 0.10.0
libtpu: 0.0.40
codegen_flags: <defaults>
</compile_context>

<pallas_src>
import functools

import jax
import jax.numpy as jnp
from jax.experimental import pallas as pl
from jax.experimental.pallas import tpu as pltpu


def _round_up(x: int, m: int) -> int:
    return ((x + m - 1) // m) * m


def _make_mf_kernel(k_dim: int):
    """Kernel: o = a @ bT, where the biases are folded into the K dimension."""
    if k_dim <= 8:
        # Tiny contraction: static-unrolled VPU outer product (exact f32),
        # keeps the vector-store slot as the only contended resource.
        def kernel(a_ref, bT_ref, o_ref):
            a = a_ref[...]            # (TM, K)
            bT = bT_ref[...]          # (K, TN)
            acc = a[:, 0:1] * bT[0:1, :]
            for k in range(1, k_dim):
                acc = acc + a[:, k:k + 1] * bT[k:k + 1, :]
            o_ref[...] = acc.astype(o_ref.dtype)
    else:
        def kernel(a_ref, bT_ref, o_ref):
            acc = jnp.dot(a_ref[...], bT_ref[...],
                          preferred_element_type=jnp.float32,
                          precision=jax.lax.Precision.HIGHEST)
            o_ref[...] = acc.astype(o_ref.dtype)
    return kernel


def biased_mf_forward(user_factors, item_factors, user_biases, item_biases,
                      users, items, *,
                      tm: int = 512, tn: int = 2048,
                      out_dtype=jnp.float32,
                      min_pallas_out_elems: int = 128 * 128):
    """pred = U[users] @ V[items].T + user_bias[users][:,None] + item_bias[items][None,:]"""
    # Embedding lookups (gather) stay in XLA glue; tables/rows are tiny (F~3),
    # so per-row DMA gather inside the kernel would be slower than jnp.take.
    u = jnp.take(user_factors, users, axis=0).astype(jnp.float32)              # (B_u, F)
    it = jnp.take(item_factors, items, axis=0).astype(jnp.float32)             # (B_i, F)
    ub = jnp.take(user_biases.reshape(-1), users, axis=0).astype(jnp.float32)  # (B_u,)
    ib = jnp.take(item_biases.reshape(-1), items, axis=0).astype(jnp.float32)  # (B_i,)

    B_u, F = u.shape
    B_i = it.shape[0]

    # Size gate: a pallas_call launch costs more than the whole tiny matmul.
    if B_u * B_i < min_pallas_out_elems:
        pred = (jnp.dot(u, it.T, precision=jax.lax.Precision.HIGHEST)
                + ib[None, :] + ub[:, None])
        return pred.astype(out_dtype)

    # Fold biases into the contraction: a = [U | ub | 1], bT = [V^T ; 1 ; ib].
    K = F + 2
    a = jnp.concatenate(
        [u, ub[:, None], jnp.ones((B_u, 1), jnp.float32)], axis=1)             # (B_u, K)
    bT = jnp.concatenate(
        [it.T, jnp.ones((1, B_i), jnp.float32), ib[None, :]], axis=0)          # (K, B_i)

    # Lane-dense tiles: TM multiple of 8 (sublanes), TN multiple of 128 (lanes).
    TM = min(tm, _round_up(B_u, 8))
    TN = min(tn, _round_up(B_i, 128))
    grid = (pl.cdiv(B_u, TM), pl.cdiv(B_i, TN))

    # Pad only the (cheap, K-wide) INPUTS to full tiles so edge blocks hold
    # well-defined zeros; the OUTPUT stays unpadded (masked edge stores).
    a_p = jnp.pad(a, ((0, grid[0] * TM - B_u), (0, 0)))                        # (#i*TM, K)
    bT_p = jnp.pad(bT, ((0, 0), (0, grid[1] * TN - B_i)))                      # (K, #j*TN)

    out_itemsize = jnp.dtype(out_dtype).itemsize
    blk_bytes = (TM * max(K, 128) * 4          # a tile (lane-padded)
                 + _round_up(K, 8) * TN * 4    # bT tile (sublane-padded)
                 + TM * TN * out_itemsize)     # output tile
    vmem_limit = 2 * blk_bytes + 8 * 1024 * 1024

    out = pl.pallas_call(
        _make_mf_kernel(K),
        out_shape=jax.ShapeDtypeStruct((B_u, B_i), out_dtype),
        grid=grid,
        in_specs=[
            pl.BlockSpec((TM, K), lambda i, j: (i, 0)),
            pl.BlockSpec((K, TN), lambda i, j: (0, j)),
        ],
        out_specs=pl.BlockSpec((TM, TN), lambda i, j: (i, j)),
        compiler_params=pltpu.CompilerParams(
            dimension_semantics=("parallel", "parallel"),
            vmem_limit_bytes=vmem_limit,
        ),
    )(a_p, bT_p)
    return out


if __name__ == "__main__":
    key = jax.random.PRNGKey(0)
    n_users, n_items, n_factors = 1000, 800, 3
    B_u, B_i = 250, 390  # ragged in both dims -> exercises masked edge tiles

    k1, k2, k3, k4, k5, k6 = jax.random.split(key, 6)
    # torch.nn.Embedding default init ~ N(0, 1)
    user_factors = jax.random.normal(k1, (n_users, n_factors), dtype=jnp.float32)
    item_factors = jax.random.normal(k2, (n_items, n_factors), dtype=jnp.float32)
    user_biases = jax.random.normal(k3, (n_users, 1), dtype=jnp.float32)
    item_biases = jax.random.normal(k4, (n_items, 1), dtype=jnp.float32)
    users = jax.random.randint(k5, (B_u,), 0, n_users, dtype=jnp.int32)
    items = jax.random.randint(k6, (B_i,), 0, n_items, dtype=jnp.int32)

    # Pure-JAX reference (matches the PyTorch forward, both bias terms).
    uf = jnp.take(user_factors, users, axis=0)
    itf = jnp.take(item_factors, items, axis=0)
    ref = (jnp.dot(uf, itf.T, precision=jax.lax.Precision.HIGHEST)
           + item_biases[items, 0][None, :] + user_biases[users, 0][:, None])

    # Default (large) tiles: grid=(1,1), masked edges in both dims.
    fwd = jax.jit(biased_mf_forward)
    pred = jax.block_until_ready(
        fwd(user_factors, item_factors, user_biases, item_biases, users, items))
    assert pred.shape == (B_u, B_i), pred.shape
    assert bool(jnp.allclose(pred, ref, atol=1e-4, rtol=1e-4)), \
        float(jnp.max(jnp.abs(pred - ref)))

    # Small tiles: multi-block ragged grid (interior unmasked, edges masked).
    fwd_small_tiles = jax.jit(
        functools.partial(biased_mf_forward, tm=128, tn=128))
    pred2 = jax.block_until_ready(
        fwd_small_tiles(user_factors, item_factors, user_biases, item_biases,
                        users, items))
    assert bool(jnp.allclose(pred2, ref, atol=1e-4, rtol=1e-4)), \
        float(jnp.max(jnp.abs(pred2 - ref)))

    # Tiny-batch path (size gate -> plain JAX) sanity check.
    pred_small = biased_mf_forward(user_factors, item_factors, user_biases,
                                   item_biases, users[:8], items[:8])
    assert bool(jnp.allclose(pred_small, ref[:8, :8], atol=1e-4, rtol=1e-4))

    print("KERNEL_OK")
</pallas_src>

<mosaic_0001>
module attributes {stable_mosaic.version = 11 : i64} {
  func.func @kernel(%arg0: i32, %arg1: i32, %arg2: memref<256x5xf32, #tpu.memory_space<vmem>>, %arg3: memref<5x512xf32, #tpu.memory_space<vmem>>, %arg4: memref<256x512xf32, #tpu.memory_space<vmem>>) attributes {dimension_semantics = [#tpu.dimension_semantics<parallel>, #tpu.dimension_semantics<parallel>], iteration_bounds = array<i64: 1, 1>, scalar_prefetch = 0 : i64, scratch_operands = 0 : i64, tpu.core_type = #tpu.core_type<tc>, window_params = [{transform_indices = @transform_0, window_bounds = array<i64: 256, 5>}, {transform_indices = @transform_1, window_bounds = array<i64: 5, 512>}, {transform_indices = @transform_2, window_bounds = array<i64: 256, 512>}]} {
    %c0 = arith.constant 0 : index
    %c0_0 = arith.constant 0 : index
    %0 = vector.load %arg2[%c0, %c0_0] : memref<256x5xf32, #tpu.memory_space<vmem>>, vector<256x5xf32>
    %c0_1 = arith.constant 0 : index
    %c0_2 = arith.constant 0 : index
    %1 = vector.load %arg3[%c0_1, %c0_2] : memref<5x512xf32, #tpu.memory_space<vmem>>, vector<5x512xf32>
    %2 = vector.extract_strided_slice %0 {offsets = [0, 0], sizes = [256, 1], strides = [1, 1]} : vector<256x5xf32> to vector<256x1xf32>
    %3 = vector.extract_strided_slice %1 {offsets = [0, 0], sizes = [1, 512], strides = [1, 1]} : vector<5x512xf32> to vector<1x512xf32>
    %4 = vector.broadcast %2 : vector<256x1xf32> to vector<256x512xf32>
    %5 = vector.broadcast %3 : vector<1x512xf32> to vector<256x512xf32>
    %6 = arith.mulf %4, %5 : vector<256x512xf32>
    %7 = vector.extract_strided_slice %0 {offsets = [0, 1], sizes = [256, 1], strides = [1, 1]} : vector<256x5xf32> to vector<256x1xf32>
    %8 = vector.extract_strided_slice %1 {offsets = [1, 0], sizes = [1, 512], strides = [1, 1]} : vector<5x512xf32> to vector<1x512xf32>
    %9 = vector.broadcast %7 : vector<256x1xf32> to vector<256x512xf32>
    %10 = vector.broadcast %8 : vector<1x512xf32> to vector<256x512xf32>
    %11 = arith.mulf %9, %10 : vector<256x512xf32>
    %12 = arith.addf %6, %11 : vector<256x512xf32>
    %13 = vector.extract_strided_slice %0 {offsets = [0, 2], sizes = [256, 1], strides = [1, 1]} : vector<256x5xf32> to vector<256x1xf32>
    %14 = vector.extract_strided_slice %1 {offsets = [2, 0], sizes = [1, 512], strides = [1, 1]} : vector<5x512xf32> to vector<1x512xf32>
    %15 = vector.broadcast %13 : vector<256x1xf32> to vector<256x512xf32>
    %16 = vector.broadcast %14 : vector<1x512xf32> to vector<256x512xf32>
    %17 = arith.mulf %15, %16 : vector<256x512xf32>
    %18 = arith.addf %12, %17 : vector<256x512xf32>
    %19 = vector.extract_strided_slice %0 {offsets = [0, 3], sizes = [256, 1], strides = [1, 1]} : vector<256x5xf32> to vector<256x1xf32>
    %20 = vector.extract_strided_slice %1 {offsets = [3, 0], sizes = [1, 512], strides = [1, 1]} : vector<5x512xf32> to vector<1x512xf32>
    %21 = vector.broadcast %19 : vector<256x1xf32> to vector<256x512xf32>
    %22 = vector.broadcast %20 : vector<1x512xf32> to vector<256x512xf32>
    %23 = arith.mulf %21, %22 : vector<256x512xf32>
    %24 = arith.addf %18, %23 : vector<256x512xf32>
    %25 = vector.extract_strided_slice %0 {offsets = [0, 4], sizes = [256, 1], strides = [1, 1]} : vector<256x5xf32> to vector<256x1xf32>
    %26 = vector.extract_strided_slice %1 {offsets = [4, 0], sizes = [1, 512], strides = [1, 1]} : vector<5x512xf32> to vector<1x512xf32>
    %27 = vector.broadcast %25 : vector<256x1xf32> to vector<256x512xf32>
    %28 = vector.broadcast %26 : vector<1x512xf32> to vector<256x512xf32>
    %29 = arith.mulf %27, %28 : vector<256x512xf32>
    %30 = arith.addf %24, %29 : vector<256x512xf32>
    %c0_3 = arith.constant 0 : index
    %c0_4 = arith.constant 0 : index
    %31 = vector.load %arg4[%c0_3, %c0_4] : memref<256x512xf32, #tpu.memory_space<vmem>>, vector<256x512xf32>
    tpu.vector_store %arg4[%c0_3, %c0_4], %30 {strides = array<i32>} : memref<256x512xf32, #tpu.memory_space<vmem>>, vector<256x512xf32>,
    return
  }
  func.func @transform_0(%arg0: i32, %arg1: i32) -> (i32, i32) {
    %c0_i32 = arith.constant 0 : i32
    %c0_i32_0 = arith.constant 0 : i32
    return %arg0, %c0_i32 : i32, i32
  }
  func.func @transform_1(%arg0: i32, %arg1: i32) -> (i32, i32) {
    %c0_i32 = arith.constant 0 : i32
    %c0_i32_0 = arith.constant 0 : i32
    return %c0_i32, %arg1 : i32, i32
  }
  func.func @transform_2(%arg0: i32, %arg1: i32) -> (i32, i32) {
    %c0_i32 = arith.constant 0 : i32
    return %arg0, %arg1 : i32, i32
  }
}

</mosaic_0001>

<llo_original>
// kernel: biased_mf_forward.1
$region0: #{biased_mf_forward.1}
  #allocation0 [shape = 'u32[]', space=smem, size = 0x4, offset = 0x4, fixed_abs, tag = 'smem constant byte address 0x4 - core index']
  #allocation1 [shape = 'u32[144,128]{1,0:T(1,128)}', space=vmem, size = 0x12000, scoped, tag = 'internal scratch']
  %s0 = inlined_call_operand.vmem [shape: f32[256,5], index: 0, kind: input, shape index: {}]
  %s1 = inlined_call_operand.vmem [shape: f32[5,512], index: 1, kind: input, shape index: {}]
  %s2 = inlined_call_operand.vmem [shape: f32[250,390], index: 2, kind: output, shape index: {}]
  %s3 = sld [smem:[#allocation0]]
  $region18: #{biased_mf_forward.1} parent=0
    _
  %s5 = ssub.s32 1, %s3
  %s6 = scalar_select 0, %s5, %s3
  // Predicated region
  $region2: #{biased_mf_forward.1} parent=0 // pred_check
    _
  $region3: #{biased_mf_forward.1} parent=0 // pred_check_branch
    %8 = sbr.rel (0) target = $region5
  $region4: #{biased_mf_forward.1} parent=0 // pred_region
    _
  $region5: #{biased_mf_forward.1} parent=0 // pred_fallthru
    _
  // Predicated region
  $region6: #{biased_mf_forward.1} parent=0 // pred_check
    _
  $region7: #{biased_mf_forward.1} parent=0 // pred_check_branch
    %10 = sbr.rel (0) target = $region9
  $region8: #{biased_mf_forward.1} parent=0 // pred_region
    _
  $region9: #{biased_mf_forward.1} parent=0 // pred_fallthru
    _
  %v11 = vld [vmem:[%s0] sm:$0xff]
  %v12 = vld [vmem:[%s0 + $0x8] sm:$0xff]
  %v13 = vld [vmem:[%s0 + $0x10] sm:$0xff]
  %v14 = vld [vmem:[%s0 + $0x18] sm:$0xff]
  %v15 = vld [vmem:[%s0 + $0x20] sm:$0xff]
  %v16 = vld [vmem:[%s0 + $0x28] sm:$0xff]
  %v17 = vld [vmem:[%s0 + $0x30] sm:$0xff]
  %v18 = vld [vmem:[%s0 + $0x38] sm:$0xff]
  %v19 = vld [vmem:[%s0 + $0x40] sm:$0xff]
  %v20 = vld [vmem:[%s0 + $0x48] sm:$0xff]
  %v21 = vld [vmem:[%s0 + $0x50] sm:$0xff]
  %v22 = vld [vmem:[%s0 + $0x58] sm:$0xff]
  %v23 = vld [vmem:[%s0 + $0x60] sm:$0xff]
  %v24 = vld [vmem:[%s0 + $0x68] sm:$0xff]
  %v25 = vld [vmem:[%s0 + $0x70] sm:$0xff]
  %v26 = vld [vmem:[%s0 + $0x78] sm:$0xff]
  %v27 = vld [vmem:[%s0 + $0x80] sm:$0xff]
  %v28 = vld [vmem:[%s0 + $0x88] sm:$0xff]
  %v29 = vld [vmem:[%s0 + $0x90] sm:$0xff]
  %v30 = vld [vmem:[%s0 + $0x98] sm:$0xff]
  %v31 = vld [vmem:[%s0 + $0xa0] sm:$0xff]
  %v32 = vld [vmem:[%s0 + $0xa8] sm:$0xff]
  %v33 = vld [vmem:[%s0 + $0xb0] sm:$0xff]
  %v34 = vld [vmem:[%s0 + $0xb8] sm:$0xff]
  %v35 = vld [vmem:[%s0 + $0xc0] sm:$0xff]
  %v36 = vld [vmem:[%s0 + $0xc8] sm:$0xff]
  %v37 = vld [vmem:[%s0 + $0xd0] sm:$0xff]
  %v38 = vld [vmem:[%s0 + $0xd8] sm:$0xff]
  %v39 = vld [vmem:[%s0 + $0xe0] sm:$0xff]
  %v40 = vld [vmem:[%s0 + $0xe8] sm:$0xff]
  %v41 = vld [vmem:[%s0 + $0xf0] sm:$0xff]
  %v42 = vld [vmem:[%s0 + $0xf8] sm:$0xff]
  %v43 = vld [vmem:[%s1] sm:$0x1f]
  %v44 = vld [vmem:[%s1 + $0x8] sm:$0x1f]
  %v45 = vld [vmem:[%s1 + $0x10] sm:$0x1f]
  %v46 = vld [vmem:[%s1 + $0x18] sm:$0x1f]
  %48 = vset.pattern.permute.xlu0 0
  %49 = vperm.xlu0 %48, %v11
  %v50 = vpop.permute.xlu0 %49
  %53 = vset.pattern.permute.xlu0 0
  %54 = vperm.xlu0 %53, %v12
  %v55 = vpop.permute.xlu0 %54
  %58 = vset.pattern.permute.xlu0 0
  %59 = vperm.xlu0 %58, %v13
  %v60 = vpop.permute.xlu0 %59
  %63 = vset.pattern.permute.xlu0 0
  %64 = vperm.xlu0 %63, %v14
  %v65 = vpop.permute.xlu0 %64
  %68 = vset.pattern.permute.xlu0 0
  %69 = vperm.xlu0 %68, %v15
  %v70 = vpop.permute.xlu0 %69
  %73 = vset.pattern.permute.xlu0 0
  %74 = vperm.xlu0 %73, %v16
  %v75 = vpop.permute.xlu0 %74
  %78 = vset.pattern.permute.xlu0 0
  %79 = vperm.xlu0 %78, %v17
  %v80 = vpop.permute.xlu0 %79
  %83 = vset.pattern.permute.xlu0 0
  %84 = vperm.xlu0 %83, %v18
  %v85 = vpop.permute.xlu0 %84
  %88 = vset.pattern.permute.xlu0 0
  %89 = vperm.xlu0 %88, %v19
  %v90 = vpop.permute.xlu0 %89
  %93 = vset.pattern.permute.xlu0 0
  %94 = vperm.xlu0 %93, %v20
  %v95 = vpop.permute.xlu0 %94
  %98 = vset.pattern.permute.xlu0 0
  %99 = vperm.xlu0 %98, %v21
  %v100 = vpop.permute.xlu0 %99
  %103 = vset.pattern.permute.xlu0 0
  %104 = vperm.xlu0 %103, %v22
  %v105 = vpop.permute.xlu0 %104
  %108 = vset.pattern.permute.xlu0 0
  %109 = vperm.xlu0 %108, %v23
  %v110 = vpop.permute.xlu0 %109
  %113 = vset.pattern.permute.xlu0 0
  %114 = vperm.xlu0 %113, %v24
  %v115 = vpop.permute.xlu0 %114
  %118 = vset.pattern.permute.xlu0 0
  %119 = vperm.xlu0 %118, %v25
  %v120 = vpop.permute.xlu0 %119
  %123 = vset.pattern.permute.xlu0 0
  %124 = vperm.xlu0 %123, %v26
  %v125 = vpop.permute.xlu0 %124
  %128 = vset.pattern.permute.xlu0 0
  %129 = vperm.xlu0 %128, %v27
  %v130 = vpop.permute.xlu0 %129
  %133 = vset.pattern.permute.xlu0 0
  %134 = vperm.xlu0 %133, %v28
  %v135 = vpop.permute.xlu0 %134
  %138 = vset.pattern.permute.xlu0 0
  %139 = vperm.xlu0 %138, %v29
  %v140 = vpop.permute.xlu0 %139
  %143 = vset.pattern.permute.xlu0 0
  %144 = vperm.xlu0 %143, %v30
  %v145 = vpop.permute.xlu0 %144
  %148 = vset.pattern.permute.xlu0 0
  %149 = vperm.xlu0 %148, %v31
  %v150 = vpop.permute.xlu0 %149
  %153 = vset.pattern.permute.xlu0 0
  %154 = vperm.xlu0 %153, %v32
  %v155 = vpop.permute.xlu0 %154
  %158 = vset.pattern.permute.xlu0 0
  %159 = vperm.xlu0 %158, %v33
  %v160 = vpop.permute.xlu0 %159
  %163 = vset.pattern.permute.xlu0 0
  %164 = vperm.xlu0 %163, %v34
  %v165 = vpop.permute.xlu0 %164
  %168 = vset.pattern.permute.xlu0 0
  %169 = vperm.xlu0 %168, %v35
  %v170 = vpop.permute.xlu0 %169
  %173 = vset.pattern.permute.xlu0 0
  %174 = vperm.xlu0 %173, %v36
  %v175 = vpop.permute.xlu0 %174
  %178 = vset.pattern.permute.xlu0 0
  %179 = vperm.xlu0 %178, %v37
  %v180 = vpop.permute.xlu0 %179
  %183 = vset.pattern.permute.xlu0 0
  %184 = vperm.xlu0 %183, %v38
  %v185 = vpop.permute.xlu0 %184
  %188 = vset.pattern.permute.xlu0 0
  %189 = vperm.xlu0 %188, %v39
  %v190 = vpop.permute.xlu0 %189
  %193 = vset.pattern.permute.xlu0 0
  %194 = vperm.xlu0 %193, %v40
  %v195 = vpop.permute.xlu0 %194
  %198 = vset.pattern.permute.xlu0 0
  %199 = vperm.xlu0 %198, %v41
  %v200 = vpop.permute.xlu0 %199
  %203 = vset.pattern.permute.xlu0 0
  %204 = vperm.xlu0 %203, %v42
  %v205 = vpop.permute.xlu0 %204
  %v207 = vlaneseq
  %v208 = vshrl.u32 %v207, 7
  %v209 = vsub.s32 0, %v208
  %v210 = vrot.slane %v43, %v209
  %v211 = vlaneseq
  %v212 = vshrl.u32 %v211, 7
  %v213 = vsub.s32 0, %v212
  %v214 = vrot.slane %v44, %v213
  %v215 = vlaneseq
  %v216 = vshrl.u32 %v215, 7
  %v217 = vsub.s32 0, %v216
  %v218 = vrot.slane %v45, %v217
  %v219 = vlaneseq
  %v220 = vshrl.u32 %v219, 7
  %v221 = vsub.s32 0, %v220
  %v222 = vrot.slane %v46, %v221
  %v223 = vmul.f32 %v50, %v210
  %v224 = vmul.f32 %v50, %v214
  %v225 = vmul.f32 %v50, %v218
  %v226 = vmul.f32 %v50, %v222
  %v227 = vmul.f32 %v55, %v210
  %v228 = vmul.f32 %v55, %v214
  %v229 = vmul.f32 %v55, %v218
  %v230 = vmul.f32 %v55, %v222
  %v231 = vmul.f32 %v60, %v210
  %v232 = vmul.f32 %v60, %v214
  %v233 = vmul.f32 %v60, %v218
  %v234 = vmul.f32 %v60, %v222
  %v235 = vmul.f32 %v65, %v210
  %v236 = vmul.f32 %v65, %v214
  %v237 = vmul.f32 %v65, %v218
  %v238 = vmul.f32 %v65, %v222
  %v239 = vmul.f32 %v70, %v210
  %v240 = vmul.f32 %v70, %v214
  %v241 = vmul.f32 %v70, %v218
  %v242 = vmul.f32 %v70, %v222
  %v243 = vmul.f32 %v75, %v210
  %v244 = vmul.f32 %v75, %v214
  %v245 = vmul.f32 %v75, %v218
  %v246 = vmul.f32 %v75, %v222
  %v247 = vmul.f32 %v80, %v210
  %v248 = vmul.f32 %v80, %v214
  %v249 = vmul.f32 %v80, %v218
  %v250 = vmul.f32 %v80, %v222
  %v251 = vmul.f32 %v85, %v210
  %v252 = vmul.f32 %v85, %v214
  %v253 = vmul.f32 %v85, %v218
  %v254 = vmul.f32 %v85, %v222
  %v255 = vmul.f32 %v90, %v210
  %v256 = vmul.f32 %v90, %v214
  %v257 = vmul.f32 %v90, %v218
  %v258 = vmul.f32 %v90, %v222
  %v259 = vmul.f32 %v95, %v210
  %v260 = vmul.f32 %v95, %v214
  %v261 = vmul.f32 %v95, %v218
  %v262 = vmul.f32 %v95, %v222
  %v263 = vmul.f32 %v100, %v210
  %v264 = vmul.f32 %v100, %v214
  %v265 = vmul.f32 %v100, %v218
  %v266 = vmul.f32 %v100, %v222
  %v267 = vmul.f32 %v105, %v210
  %v268 = vmul.f32 %v105, %v214
  %v269 = vmul.f32 %v105, %v218
  %v270 = vmul.f32 %v105, %v222
  %v271 = vmul.f32 %v110, %v210
  %v272 = vmul.f32 %v110, %v214
  %v273 = vmul.f32 %v110, %v218
  %v274 = vmul.f32 %v110, %v222
  %v275 = vmul.f32 %v115, %v210
  %v276 = vmul.f32 %v115, %v214
  %v277 = vmul.f32 %v115, %v218
  %v278 = vmul.f32 %v115, %v222
  %v279 = vmul.f32 %v120, %v210
  %v280 = vmul.f32 %v120, %v214
  %v281 = vmul.f32 %v120, %v218
  %v282 = vmul.f32 %v120, %v222
  %v283 = vmul.f32 %v125, %v210
  %v284 = vmul.f32 %v125, %v214
  %v285 = vmul.f32 %v125, %v218
  %v286 = vmul.f32 %v125, %v222
  %v287 = vmul.f32 %v130, %v210
  %v288 = vmul.f32 %v130, %v214
  %v289 = vmul.f32 %v130, %v218
  %v290 = vmul.f32 %v130, %v222
  %v291 = vmul.f32 %v135, %v210
  %v292 = vmul.f32 %v135, %v214
  %v293 = vmul.f32 %v135, %v218
  %v294 = vmul.f32 %v135, %v222
  %v295 = vmul.f32 %v140, %v210
  %v296 = vmul.f32 %v140, %v214
  %v297 = vmul.f32 %v140, %v218
  %v298 = vmul.f32 %v140, %v222
  %v299 = vmul.f32 %v145, %v210
  %v300 = vmul.f32 %v145, %v214
  %v301 = vmul.f32 %v145, %v218
  %v302 = vmul.f32 %v145, %v222
  %v303 = vmul.f32 %v150, %v210
  %v304 = vmul.f32 %v150, %v214
  %v305 = vmul.f32 %v150, %v218
  %v306 = vmul.f32 %v150, %v222
  %v307 = vmul.f32 %v155, %v210
  %v308 = vmul.f32 %v155, %v214
  %v309 = vmul.f32 %v155, %v218
  %v310 = vmul.f32 %v155, %v222
  %v311 = vmul.f32 %v160, %v210
  %v312 = vmul.f32 %v160, %v214
  %v313 = vmul.f32 %v160, %v218
  %v314 = vmul.f32 %v160, %v222
  %v315 = vmul.f32 %v165, %v210
  %v316 = vmul.f32 %v165, %v214
  %v317 = vmul.f32 %v165, %v218
  %v318 = vmul.f32 %v165, %v222
  %v319 = vmul.f32 %v170, %v210
  %v320 = vmul.f32 %v170, %v214
  %v321 = vmul.f32 %v170, %v218
  %v322 = vmul.f32 %v170, %v222
  %v323 = vmul.f32 %v175, %v210
  %v324 = vmul.f32 %v175, %v214
  %v325 = vmul.f32 %v175, %v218
  %v326 = vmul.f32 %v175, %v222
  %v327 = vmul.f32 %v180, %v210
  %v328 = vmul.f32 %v180, %v214
  %v329 = vmul.f32 %v180, %v218
  %v330 = vmul.f32 %v180, %v222
  %v331 = vmul.f32 %v185, %v210
  %v332 = vmul.f32 %v185, %v214
  %v333 = vmul.f32 %v185, %v218
  %v334 = vmul.f32 %v185, %v222
  %v335 = vmul.f32 %v190, %v210
  %v336 = vmul.f32 %v190, %v214
  %v337 = vmul.f32 %v190, %v218
  %v338 = vmul.f32 %v190, %v222
  %v339 = vmul.f32 %v195, %v210
  %v340 = vmul.f32 %v195, %v214
  %v341 = vmul.f32 %v195, %v218
  %v342 = vmul.f32 %v195, %v222
  %v343 = vmul.f32 %v200, %v210
  %v344 = vmul.f32 %v200, %v214
  %v345 = vmul.f32 %v200, %v218
  %v346 = vmul.f32 %v200, %v222
  %v347 = vmul.f32 %v205, %v210
  %v348 = vmul.f32 %v205, %v214
  %v349 = vmul.f32 %v205, %v218
  %v350 = vmul.f32 %v205, %v222
  %351 = vset.pattern.permute.xlu0 1
  %352 = vperm.xlu0 %351, %v11
  %v353 = vpop.permute.xlu0 %352
  %355 = vset.pattern.permute.xlu0 1
  %356 = vperm.xlu0 %355, %v12
  %v357 = vpop.permute.xlu0 %356
  %359 = vset.pattern.permute.xlu0 1
  %360 = vperm.xlu0 %359, %v13
  %v361 = vpop.permute.xlu0 %360
  %363 = vset.pattern.permute.xlu0 1
  %364 = vperm.xlu0 %363, %v14
  %v365 = vpop.permute.xlu0 %364
  %367 = vset.pattern.permute.xlu0 1
  %368 = vperm.xlu0 %367, %v15
  %v369 = vpop.permute.xlu0 %368
  %371 = vset.pattern.permute.xlu0 1
  %372 = vperm.xlu0 %371, %v16
  %v373 = vpop.permute.xlu0 %372
  %375 = vset.pattern.permute.xlu0 1
  %376 = vperm.xlu0 %375, %v17
  %v377 = vpop.permute.xlu0 %376
  %379 = vset.pattern.permute.xlu0 1
  %380 = vperm.xlu0 %379, %v18
  %v381 = vpop.permute.xlu0 %380
  %383 = vset.pattern.permute.xlu0 1
  %384 = vperm.xlu0 %383, %v19
  %v385 = vpop.permute.xlu0 %384
  %387 = vset.pattern.permute.xlu0 1
  %388 = vperm.xlu0 %387, %v20
  %v389 = vpop.permute.xlu0 %388
  %391 = vset.pattern.permute.xlu0 1
  %392 = vperm.xlu0 %391, %v21
  %v393 = vpop.permute.xlu0 %392
  %395 = vset.pattern.permute.xlu0 1
  %396 = vperm.xlu0 %395, %v22
  %v397 = vpop.permute.xlu0 %396
  %399 = vset.pattern.permute.xlu0 1
  %400 = vperm.xlu0 %399, %v23
  %v401 = vpop.permute.xlu0 %400
  %403 = vset.pattern.permute.xlu0 1
  %404 = vperm.xlu0 %403, %v24
  %v405 = vpop.permute.xlu0 %404
  %407 = vset.pattern.permute.xlu0 1
  %408 = vperm.xlu0 %407, %v25
  %v409 = vpop.permute.xlu0 %408
  %411 = vset.pattern.permute.xlu0 1
  %412 = vperm.xlu0 %411, %v26
  %v413 = vpop.permute.xlu0 %412
  %415 = vset.pattern.permute.xlu0 1
  %416 = vperm.xlu0 %415, %v27
  %v417 = vpop.permute.xlu0 %416
  %419 = vset.pattern.permute.xlu0 1
  %420 = vperm.xlu0 %419, %v28
  %v421 = vpop.permute.xlu0 %420
  %423 = vset.pattern.permute.xlu0 1
  %424 = vperm.xlu0 %423, %v29
  %v425 = vpop.permute.xlu0 %424
  %427 = vset.pattern.permute.xlu0 1
  %428 = vperm.xlu0 %427, %v30
  %v429 = vpop.permute.xlu0 %428
  %431 = vset.pattern.permute.xlu0 1
  %432 = vperm.xlu0 %431, %v31
  %v433 = vpop.permute.xlu0 %432
  %435 = vset.pattern.permute.xlu0 1
  %436 = vperm.xlu0 %435, %v32
  %v437 = vpop.permute.xlu0 %436
  %439 = vset.pattern.permute.xlu0 1
  %440 = vperm.xlu0 %439, %v33
  %v441 = vpop.permute.xlu0 %440
  %443 = vset.pattern.permute.xlu0 1
  %444 = vperm.xlu0 %443, %v34
  %v445 = vpop.permute.xlu0 %444
  %447 = vset.pattern.permute.xlu0 1
  %448 = vperm.xlu0 %447, %v35
  %v449 = vpop.permute.xlu0 %448
  %451 = vset.pattern.permute.xlu0 1
  %452 = vperm.xlu0 %451, %v36
  %v453 = vpop.permute.xlu0 %452
  %455 = vset.pattern.permute.xlu0 1
  %456 = vperm.xlu0 %455, %v37
  %v457 = vpop.permute.xlu0 %456
  %459 = vset.pattern.permute.xlu0 1
  %460 = vperm.xlu0 %459, %v38
  %v461 = vpop.permute.xlu0 %460
  %463 = vset.pattern.permute.xlu0 1
  %464 = vperm.xlu0 %463, %v39
  %v465 = vpop.permute.xlu0 %464
  %467 = vset.pattern.permute.xlu0 1
  %468 = vperm.xlu0 %467, %v40
  %v469 = vpop.permute.xlu0 %468
  %471 = vset.pattern.permute.xlu0 1
  %472 = vperm.xlu0 %471, %v41
  %v473 = vpop.permute.xlu0 %472
  %475 = vset.pattern.permute.xlu0 1
  %476 = vperm.xlu0 %475, %v42
  %v477 = vpop.permute.xlu0 %476
  %v479 = vlaneseq
  %v480 = vshrl.u32 %v479, 7
  %v481 = vsub.s32 1, %v480
  %v482 = vrot.slane %v43, %v481
  %v483 = vlaneseq
  %v484 = vshrl.u32 %v483, 7
  %v485 = vsub.s32 1, %v484
  %v486 = vrot.slane %v44, %v485
  %v487 = vlaneseq
  %v488 = vshrl.u32 %v487, 7
  %v489 = vsub.s32 1, %v488
  %v490 = vrot.slane %v45, %v489
  %v491 = vlaneseq
  %v492 = vshrl.u32 %v491, 7
  %v493 = vsub.s32 1, %v492
  %v494 = vrot.slane %v46, %v493
  %v495 = vmul.f32 %v353, %v482
  %v496 = vmul.f32 %v353, %v486
  %v497 = vmul.f32 %v353, %v490
  %v498 = vmul.f32 %v353, %v494
  %v499 = vmul.f32 %v357, %v482
  %v500 = vmul.f32 %v357, %v486
  %v501 = vmul.f32 %v357, %v490
  %v502 = vmul.f32 %v357, %v494
  %v503 = vmul.f32 %v361, %v482
  %v504 = vmul.f32 %v361, %v486
  %v505 = vmul.f32 %v361, %v490
  %v506 = vmul.f32 %v361, %v494
  %v507 = vmul.f32 %v365, %v482
  %v508 = vmul.f32 %v365, %v486
  %v509 = vmul.f32 %v365, %v490
  %v510 = vmul.f32 %v365, %v494
  %v511 = vmul.f32 %v369, %v482
  %v512 = vmul.f32 %v369, %v486
  %v513 = vmul.f32 %v369, %v490
  %v514 = vmul.f32 %v369, %v494
  %v515 = vmul.f32 %v373, %v482
  %v516 = vmul.f32 %v373, %v486
  %v517 = vmul.f32 %v373, %v490
  %v518 = vmul.f32 %v373, %v494
  %v519 = vmul.f32 %v377, %v482
  %v520 = vmul.f32 %v377, %v486
  %v521 = vmul.f32 %v377, %v490
  %v522 = vmul.f32 %v377, %v494
  %v523 = vmul.f32 %v381, %v482
  %v524 = vmul.f32 %v381, %v486
  %v525 = vmul.f32 %v381, %v490
  %v526 = vmul.f32 %v381, %v494
  %v527 = vmul.f32 %v385, %v482
  %v528 = vmul.f32 %v385, %v486
  %v529 = vmul.f32 %v385, %v490
  %v530 = vmul.f32 %v385, %v494
  %v531 = vmul.f32 %v389, %v482
  %v532 = vmul.f32 %v389, %v486
  %v533 = vmul.f32 %v389, %v490
  %v534 = vmul.f32 %v389, %v494
  %v535 = vmul.f32 %v393, %v482
  %v536 = vmul.f32 %v393, %v486
  %v537 = vmul.f32 %v393, %v490
  %v538 = vmul.f32 %v393, %v494
  %v539 = vmul.f32 %v397, %v482
  %v540 = vmul.f32 %v397, %v486
  %v541 = vmul.f32 %v397, %v490
  %v542 = vmul.f32 %v397, %v494
  %v543 = vmul.f32 %v401, %v482
  %v544 = vmul.f32 %v401, %v486
  %v545 = vmul.f32 %v401, %v490
  %v546 = vmul.f32 %v401, %v494
  %v547 = vmul.f32 %v405, %v482
  %v548 = vmul.f32 %v405, %v486
  %v549 = vmul.f32 %v405, %v490
  %v550 = vmul.f32 %v405, %v494
  %v551 = vmul.f32 %v409, %v482
  %v552 = vmul.f32 %v409, %v486
  %v553 = vmul.f32 %v409, %v490
  %v554 = vmul.f32 %v409, %v494
  %v555 = vmul.f32 %v413, %v482
  %v556 = vmul.f32 %v413, %v486
  %v557 = vmul.f32 %v413, %v490
  %v558 = vmul.f32 %v413, %v494
  %v559 = vmul.f32 %v417, %v482
  %v560 = vmul.f32 %v417, %v486
  %v561 = vmul.f32 %v417, %v490
  %v562 = vmul.f32 %v417, %v494
  %v563 = vmul.f32 %v421, %v482
  %v564 = vmul.f32 %v421, %v486
  %v565 = vmul.f32 %v421, %v490
  %v566 = vmul.f32 %v421, %v494
  %v567 = vmul.f32 %v425, %v482
  %v568 = vmul.f32 %v425, %v486
  %v569 = vmul.f32 %v425, %v490
  %v570 = vmul.f32 %v425, %v494
  %v571 = vmul.f32 %v429, %v482
  %v572 = vmul.f32 %v429, %v486
  %v573 = vmul.f32 %v429, %v490
  %v574 = vmul.f32 %v429, %v494
  %v575 = vmul.f32 %v433, %v482
  %v576 = vmul.f32 %v433, %v486
  %v577 = vmul.f32 %v433, %v490
  %v578 = vmul.f32 %v433, %v494
  %v579 = vmul.f32 %v437, %v482
  %v580 = vmul.f32 %v437, %v486
  %v581 = vmul.f32 %v437, %v490
  %v582 = vmul.f32 %v437, %v494
  %v583 = vmul.f32 %v441, %v482
  %v584 = vmul.f32 %v441, %v486
  %v585 = vmul.f32 %v441, %v490
  %v586 = vmul.f32 %v441, %v494
  %v587 = vmul.f32 %v445, %v482
  %v588 = vmul.f32 %v445, %v486
  %v589 = vmul.f32 %v445, %v490
  %v590 = vmul.f32 %v445, %v494
  %v591 = vmul.f32 %v449, %v482
  %v592 = vmul.f32 %v449, %v486
  %v593 = vmul.f32 %v449, %v490
  %v594 = vmul.f32 %v449, %v494
  %v595 = vmul.f32 %v453, %v482
  %v596 = vmul.f32 %v453, %v486
  %v597 = vmul.f32 %v453, %v490
  %v598 = vmul.f32 %v453, %v494
  %v599 = vmul.f32 %v457, %v482
  %v600 = vmul.f32 %v457, %v486
  %v601 = vmul.f32 %v457, %v490
  %v602 = vmul.f32 %v457, %v494
  %v603 = vmul.f32 %v461, %v482
  %v604 = vmul.f32 %v461, %v486
  %v605 = vmul.f32 %v461, %v490
  %v606 = vmul.f32 %v461, %v494
  %v607 = vmul.f32 %v465, %v482
  %v608 = vmul.f32 %v465, %v486
  %v609 = vmul.f32 %v465, %v490
  %v610 = vmul.f32 %v465, %v494
  %v611 = vmul.f32 %v469, %v482
  %v612 = vmul.f32 %v469, %v486
  %v613 = vmul.f32 %v469, %v490
  %v614 = vmul.f32 %v469, %v494
  %v615 = vmul.f32 %v473, %v482
  %v616 = vmul.f32 %v473, %v486
  %v617 = vmul.f32 %v473, %v490
  %v618 = vmul.f32 %v473, %v494
  %v619 = vmul.f32 %v477, %v482
  %v620 = vmul.f32 %v477, %v486
  %v621 = vmul.f32 %v477, %v490
  %v622 = vmul.f32 %v477, %v494
  %v623 = vadd.f32 %v223, %v495
  %v624 = vadd.f32 %v224, %v496
  %v625 = vadd.f32 %v225, %v497
  %v626 = vadd.f32 %v226, %v498
  %v627 = vadd.f32 %v227, %v499
  %v628 = vadd.f32 %v228, %v500
  %v629 = vadd.f32 %v229, %v501
  %v630 = vadd.f32 %v230, %v502
  %v631 = vadd.f32 %v231, %v503
  %v632 = vadd.f32 %v232, %v504
  %v633 = vadd.f32 %v233, %v505
  %v634 = vadd.f32 %v234, %v506
  %v635 = vadd.f32 %v235, %v507
  %v636 = vadd.f32 %v236, %v508
  %v637 = vadd.f32 %v237, %v509
  %v638 = vadd.f32 %v238, %v510
  %v639 = vadd.f32 %v239, %v511
  %v640 = vadd.f32 %v240, %v512
  %v641 = vadd.f32 %v241, %v513
  %v642 = vadd.f32 %v242, %v514
  %v643 = vadd.f32 %v243, %v515
  %v644 = vadd.f32 %v244, %v516
  %v645 = vadd.f32 %v245, %v517
  %v646 = vadd.f32 %v246, %v518
  %v647 = vadd.f32 %v247, %v519
  %v648 = vadd.f32 %v248, %v520
  %v649 = vadd.f32 %v249, %v521
  %v650 = vadd.f32 %v250, %v522
  %v651 = vadd.f32 %v251, %v523
  %v652 = vadd.f32 %v252, %v524
  %v653 = vadd.f32 %v253, %v525
  %v654 = vadd.f32 %v254, %v526
  %v655 = vadd.f32 %v255, %v527
  %v656 = vadd.f32 %v256, %v528
  %v657 = vadd.f32 %v257, %v529
  %v658 = vadd.f32 %v258, %v530
  %v659 = vadd.f32 %v259, %v531
  %v660 = vadd.f32 %v260, %v532
  %v661 = vadd.f32 %v261, %v533
  %v662 = vadd.f32 %v262, %v534
  %v663 = vadd.f32 %v263, %v535
  %v664 = vadd.f32 %v264, %v536
  %v665 = vadd.f32 %v265, %v537
  %v666 = vadd.f32 %v266, %v538
  %v667 = vadd.f32 %v267, %v539
  %v668 = vadd.f32 %v268, %v540
  %v669 = vadd.f32 %v269, %v541
  %v670 = vadd.f32 %v270, %v542
  %v671 = vadd.f32 %v271, %v543
  %v672 = vadd.f32 %v272, %v544
  %v673 = vadd.f32 %v273, %v545
  %v674 = vadd.f32 %v274, %v546
  %v675 = vadd.f32 %v275, %v547
  %v676 = vadd.f32 %v276, %v548
  %v677 = vadd.f32 %v277, %v549
  %v678 = vadd.f32 %v278, %v550
  %v679 = vadd.f32 %v279, %v551
  %v680 = vadd.f32 %v280, %v552
  %v681 = vadd.f32 %v281, %v553
  %v682 = vadd.f32 %v282, %v554
  %v683 = vadd.f32 %v283, %v555
  %v684 = vadd.f32 %v284, %v556
  %v685 = vadd.f32 %v285, %v557
  %v686 = vadd.f32 %v286, %v558
  %v687 = vadd.f32 %v287, %v559
  %v688 = vadd.f32 %v288, %v560
  %v689 = vadd.f32 %v289, %v561
  %v690 = vadd.f32 %v290, %v562
  %v691 = vadd.f32 %v291, %v563
  %v692 = vadd.f32 %v292, %v564
  %v693 = vadd.f32 %v293, %v565
  %v694 = vadd.f32 %v294, %v566
  %v695 = vadd.f32 %v295, %v567
  %v696 = vadd.f32 %v296, %v568
  %v697 = vadd.f32 %v297, %v569
  %v698 = vadd.f32 %v298, %v570
  %v699 = vadd.f32 %v299, %v571
  %v700 = vadd.f32 %v300, %v572
  %v701 = vadd.f32 %v301, %v573
  %v702 = vadd.f32 %v302, %v574
  %v703 = vadd.f32 %v303, %v575
  %v704 = vadd.f32 %v304, %v576
  %v705 = vadd.f32 %v305, %v577
  %v706 = vadd.f32 %v306, %v578
  %v707 = vadd.f32 %v307, %v579
  %v708 = vadd.f32 %v308, %v580
  %v709 = vadd.f32 %v309, %v581
  %v710 = vadd.f32 %v310, %v582
  %v711 = vadd.f32 %v311, %v583
  %v712 = vadd.f32 %v312, %v584
  %v713 = vadd.f32 %v313, %v585
  %v714 = vadd.f32 %v314, %v586
  %v715 = vadd.f32 %v315, %v587
  %v716 = vadd.f32 %v316, %v588
  %v717 = vadd.f32 %v317, %v589
  %v718 = vadd.f32 %v318, %v590
  %v719 = vadd.f32 %v319, %v591
  %v720 = vadd.f32 %v320, %v592
  %v721 = vadd.f32 %v321, %v593
  %v722 = vadd.f32 %v322, %v594
  %v723 = vadd.f32 %v323, %v595
  %v724 = vadd.f32 %v324, %v596
  %v725 = vadd.f32 %v325, %v597
  %v726 = vadd.f32 %v326, %v598
  %v727 = vadd.f32 %v327, %v599
  %v728 = vadd.f32 %v328, %v600
  %v729 = vadd.f32 %v329, %v601
  %v730 = vadd.f32 %v330, %v602
  %v731 = vadd.f32 %v331, %v603
  %v732 = vadd.f32 %v332, %v604
  %v733 = vadd.f32 %v333, %v605
  %v734 = vadd.f32 %v334, %v606
  %v735 = vadd.f32 %v335, %v607
  %v736 = vadd.f32 %v336, %v608
  %v737 = vadd.f32 %v337, %v609
  %v738 = vadd.f32 %v338, %v610
  %v739 = vadd.f32 %v339, %v611
  %v740 = vadd.f32 %v340, %v612
  %v741 = vadd.f32 %v341, %v613
  %v742 = vadd.f32 %v342, %v614
  %v743 = vadd.f32 %v343, %v615
  %v744 = vadd.f32 %v344, %v616
  %v745 = vadd.f32 %v345, %v617
  %v746 = vadd.f32 %v346, %v618
  %v747 = vadd.f32 %v347, %v619
  %v748 = vadd.f32 %v348, %v620
  %v749 = vadd.f32 %v349, %v621
  %v750 = vadd.f32 %v350, %v622
  %751 = vset.pattern.permute.xlu0 2
  %752 = vperm.xlu0 %751, %v11
  %v753 = vpop.permute.xlu0 %752
  %755 = vset.pattern.permute.xlu0 2
  %756 = vperm.xlu0 %755, %v12
  %v757 = vpop.permute.xlu0 %756
  %759 = vset.pattern.permute.xlu0 2
  %760 = vperm.xlu0 %759, %v13
  %v761 = vpop.permute.xlu0 %760
  %763 = vset.pattern.permute.xlu0 2
  %764 = vperm.xlu0 %763, %v14
  %v765 = vpop.permute.xlu0 %764
  %767 = vset.pattern.permute.xlu0 2
  %768 = vperm.xlu0 %767, %v15
  %v769 = vpop.permute.xlu0 %768
  %771 = vset.pattern.permute.xlu0 2
  %772 = vperm.xlu0 %771, %v16
  %v773 = vpop.permute.xlu0 %772
  %775 = vset.pattern.permute.xlu0 2
  %776 = vperm.xlu0 %775, %v17
  %v777 = vpop.permute.xlu0 %776
  %779 = vset.pattern.permute.xlu0 2
  %780 = vperm.xlu0 %779, %v18
  %v781 = vpop.permute.xlu0 %780
  %783 = vset.pattern.permute.xlu0 2
  %784 = vperm.xlu0 %783, %v19
  %v785 = vpop.permute.xlu0 %784
  %787 = vset.pattern.permute.xlu0 2
  %788 = vperm.xlu0 %787, %v20
  %v789 = vpop.permute.xlu0 %788
  %791 = vset.pattern.permute.xlu0 2
  %792 = vperm.xlu0 %791, %v21
  %v793 = vpop.permute.xlu0 %792
  %795 = vset.pattern.permute.xlu0 2
  %796 = vperm.xlu0 %795, %v22
  %v797 = vpop.permute.xlu0 %796
  %799 = vset.pattern.permute.xlu0 2
  %800 = vperm.xlu0 %799, %v23
  %v801 = vpop.permute.xlu0 %800
  %803 = vset.pattern.permute.xlu0 2
  %804 = vperm.xlu0 %803, %v24
  %v805 = vpop.permute.xlu0 %804
  %807 = vset.pattern.permute.xlu0 2
  %808 = vperm.xlu0 %807, %v25
  %v809 = vpop.permute.xlu0 %808
  %811 = vset.pattern.permute.xlu0 2
  %812 = vperm.xlu0 %811, %v26
  %v813 = vpop.permute.xlu0 %812
  %815 = vset.pattern.permute.xlu0 2
  %816 = vperm.xlu0 %815, %v27
  %v817 = vpop.permute.xlu0 %816
  %819 = vset.pattern.permute.xlu0 2
  %820 = vperm.xlu0 %819, %v28
  %v821 = vpop.permute.xlu0 %820
  %823 = vset.pattern.permute.xlu0 2
  %824 = vperm.xlu0 %823, %v29
  %v825 = vpop.permute.xlu0 %824
  %827 = vset.pattern.permute.xlu0 2
  %828 = vperm.xlu0 %827, %v30
  %v829 = vpop.permute.xlu0 %828
  %831 = vset.pattern.permute.xlu0 2
  %832 = vperm.xlu0 %831, %v31
  %v833 = vpop.permute.xlu0 %832
  %835 = vset.pattern.permute.xlu0 2
  %836 = vperm.xlu0 %835, %v32
  %v837 = vpop.permute.xlu0 %836
  %839 = vset.pattern.permute.xlu0 2
  %840 = vperm.xlu0 %839, %v33
  %v841 = vpop.permute.xlu0 %840
  %843 = vset.pattern.permute.xlu0 2
  %844 = vperm.xlu0 %843, %v34
  %v845 = vpop.permute.xlu0 %844
  %847 = vset.pattern.permute.xlu0 2
  %848 = vperm.xlu0 %847, %v35
  %v849 = vpop.permute.xlu0 %848
  %851 = vset.pattern.permute.xlu0 2
  %852 = vperm.xlu0 %851, %v36
  %v853 = vpop.permute.xlu0 %852
  %855 = vset.pattern.permute.xlu0 2
  %856 = vperm.xlu0 %855, %v37
  %v857 = vpop.permute.xlu0 %856
  %859 = vset.pattern.permute.xlu0 2
  %860 = vperm.xlu0 %859, %v38
  %v861 = vpop.permute.xlu0 %860
  %863 = vset.pattern.permute.xlu0 2
  %864 = vperm.xlu0 %863, %v39
  %v865 = vpop.permute.xlu0 %864
  %867 = vset.pattern.permute.xlu0 2
  %868 = vperm.xlu0 %867, %v40
  %v869 = vpop.permute.xlu0 %868
  %871 = vset.pattern.permute.xlu0 2
  %872 = vperm.xlu0 %871, %v41
  %v873 = vpop.permute.xlu0 %872
  %875 = vset.pattern.permute.xlu0 2
  %876 = vperm.xlu0 %875, %v42
  %v877 = vpop.permute.xlu0 %876
  %v879 = vlaneseq
  %v880 = vshrl.u32 %v879, 7
  %v881 = vsub.s32 2, %v880
  %v882 = vrot.slane %v43, %v881
  %v883 = vlaneseq
  %v884 = vshrl.u32 %v883, 7
  %v885 = vsub.s32 2, %v884
  %v886 = vrot.slane %v44, %v885
  %v887 = vlaneseq
  %v888 = vshrl.u32 %v887, 7
  %v889 = vsub.s32 2, %v888
  %v890 = vrot.slane %v45, %v889
  %v891 = vlaneseq
  %v892 = vshrl.u32 %v891, 7
  %v893 = vsub.s32 2, %v892
  %v894 = vrot.slane %v46, %v893
  %v895 = vmul.f32 %v753, %v882
  %v896 = vmul.f32 %v753, %v886
  %v897 = vmul.f32 %v753, %v890
  %v898 = vmul.f32 %v753, %v894
  %v899 = vmul.f32 %v757, %v882
  %v900 = vmul.f32 %v757, %v886
  %v901 = vmul.f32 %v757, %v890
  %v902 = vmul.f32 %v757, %v894
  %v903 = vmul.f32 %v761, %v882
  %v904 = vmul.f32 %v761, %v886
  %v905 = vmul.f32 %v761, %v890
  %v906 = vmul.f32 %v761, %v894
  %v907 = vmul.f32 %v765, %v882
  %v908 = vmul.f32 %v765, %v886
  %v909 = vmul.f32 %v765, %v890
  %v910 = vmul.f32 %v765, %v894
  %v911 = vmul.f32 %v769, %v882
  %v912 = vmul.f32 %v769, %v886
  %v913 = vmul.f32 %v769, %v890
  %v914 = vmul.f32 %v769, %v894
  %v915 = vmul.f32 %v773, %v882
  %v916 = vmul.f32 %v773, %v886
  %v917 = vmul.f32 %v773, %v890
  %v918 = vmul.f32 %v773, %v894
  %v919 = vmul.f32 %v777, %v882
  %v920 = vmul.f32 %v777, %v886
  %v921 = vmul.f32 %v777, %v890
  %v922 = vmul.f32 %v777, %v894
  %v923 = vmul.f32 %v781, %v882
  %v924 = vmul.f32 %v781, %v886
  %v925 = vmul.f32 %v781, %v890
  %v926 = vmul.f32 %v781, %v894
  %v927 = vmul.f32 %v785, %v882
  %v928 = vmul.f32 %v785, %v886
  %v929 = vmul.f32 %v785, %v890
  %v930 = vmul.f32 %v785, %v894
  %v931 = vmul.f32 %v789, %v882
  %v932 = vmul.f32 %v789, %v886
  %v933 = vmul.f32 %v789, %v890
  %v934 = vmul.f32 %v789, %v894
  %v935 = vmul.f32 %v793, %v882
  %v936 = vmul.f32 %v793, %v886
  %v937 = vmul.f32 %v793, %v890
  %v938 = vmul.f32 %v793, %v894
  %v939 = vmul.f32 %v797, %v882
  %v940 = vmul.f32 %v797, %v886
  %v941 = vmul.f32 %v797, %v890
  %v942 = vmul.f32 %v797, %v894
  %v943 = vmul.f32 %v801, %v882
  %v944 = vmul.f32 %v801, %v886
  %v945 = vmul.f32 %v801, %v890
  %v946 = vmul.f32 %v801, %v894
  %v947 = vmul.f32 %v805, %v882
  %v948 = vmul.f32 %v805, %v886
  %v949 = vmul.f32 %v805, %v890
  %v950 = vmul.f32 %v805, %v894
  %v951 = vmul.f32 %v809, %v882
  %v952 = vmul.f32 %v809, %v886
  %v953 = vmul.f32 %v809, %v890
  %v954 = vmul.f32 %v809, %v894
  %v955 = vmul.f32 %v813, %v882
  %v956 = vmul.f32 %v813, %v886
  %v957 = vmul.f32 %v813, %v890
  %v958 = vmul.f32 %v813, %v894
  %v959 = vmul.f32 %v817, %v882
  %v960 = vmul.f32 %v817, %v886
  %v961 = vmul.f32 %v817, %v890
  %v962 = vmul.f32 %v817, %v894
  %v963 = vmul.f32 %v821, %v882
  %v964 = vmul.f32 %v821, %v886
  %v965 = vmul.f32 %v821, %v890
  %v966 = vmul.f32 %v821, %v894
  %v967 = vmul.f32 %v825, %v882
  %v968 = vmul.f32 %v825, %v886
  %v969 = vmul.f32 %v825, %v890
  %v970 = vmul.f32 %v825, %v894
  %v971 = vmul.f32 %v829, %v882
  %v972 = vmul.f32 %v829, %v886
  %v973 = vmul.f32 %v829, %v890
  %v974 = vmul.f32 %v829, %v894
  %v975 = vmul.f32 %v833, %v882
  %v976 = vmul.f32 %v833, %v886
  %v977 = vmul.f32 %v833, %v890
  %v978 = vmul.f32 %v833, %v894
  %v979 = vmul.f32 %v837, %v882
  %v980 = vmul.f32 %v837, %v886
  %v981 = vmul.f32 %v837, %v890
  %v982 = vmul.f32 %v837, %v894
  %v983 = vmul.f32 %v841, %v882
  %v984 = vmul.f32 %v841, %v886
  %v985 = vmul.f32 %v841, %v890
  %v986 = vmul.f32 %v841, %v894
  %v987 = vmul.f32 %v845, %v882
  %v988 = vmul.f32 %v845, %v886
  %v989 = vmul.f32 %v845, %v890
  %v990 = vmul.f32 %v845, %v894
  %v991 = vmul.f32 %v849, %v882
  %v992 = vmul.f32 %v849, %v886
  %v993 = vmul.f32 %v849, %v890
  %v994 = vmul.f32 %v849, %v894
  %v995 = vmul.f32 %v853, %v882
  %v996 = vmul.f32 %v853, %v886
  %v997 = vmul.f32 %v853, %v890
  %v998 = vmul.f32 %v853, %v894
  %v999 = vmul.f32 %v857, %v882
  %v1000 = vmul.f32 %v857, %v886
  %v1001 = vmul.f32 %v857, %v890
  %v1002 = vmul.f32 %v857, %v894
  %v1003 = vmul.f32 %v861, %v882
  %v1004 = vmul.f32 %v861, %v886
  %v1005 = vmul.f32 %v861, %v890
  %v1006 = vmul.f32 %v861, %v894
  %v1007 = vmul.f32 %v865, %v882
  %v1008 = vmul.f32 %v865, %v886
  %v1009 = vmul.f32 %v865, %v890
  %v1010 = vmul.f32 %v865, %v894
  %v1011 = vmul.f32 %v869, %v882
  %v1012 = vmul.f32 %v869, %v886
  %v1013 = vmul.f32 %v869, %v890
  %v1014 = vmul.f32 %v869, %v894
  %v1015 = vmul.f32 %v873, %v882
  %v1016 = vmul.f32 %v873, %v886
  %v1017 = vmul.f32 %v873, %v890
  %v1018 = vmul.f32 %v873, %v894
  %v1019 = vmul.f32 %v877, %v882
  %v1020 = vmul.f32 %v877, %v886
  %v1021 = vmul.f32 %v877, %v890
  %v1022 = vmul.f32 %v877, %v894
  %v1023 = vadd.f32 %v623, %v895
  %v1024 = vadd.f32 %v624, %v896
  %v1025 = vadd.f32 %v625, %v897
  %v1026 = vadd.f32 %v626, %v898
  %v1027 = vadd.f32 %v627, %v899
  %v1028 = vadd.f32 %v628, %v900
  %v1029 = vadd.f32 %v629, %v901
  %v1030 = vadd.f32 %v630, %v902
  %v1031 = vadd.f32 %v631, %v903
  %v1032 = vadd.f32 %v632, %v904
  %v1033 = vadd.f32 %v633, %v905
  %v1034 = vadd.f32 %v634, %v906
  %v1035 = vadd.f32 %v635, %v907
  %v1036 = vadd.f32 %v636, %v908
  %v1037 = vadd.f32 %v637, %v909
  %v1038 = vadd.f32 %v638, %v910
  %v1039 = vadd.f32 %v639, %v911
  %v1040 = vadd.f32 %v640, %v912
  %v1041 = vadd.f32 %v641, %v913
  %v1042 = vadd.f32 %v642, %v914
  %v1043 = vadd.f32 %v643, %v915
  %v1044 = vadd.f32 %v644, %v916
  %v1045 = vadd.f32 %v645, %v917
  %v1046 = vadd.f32 %v646, %v918
  %v1047 = vadd.f32 %v647, %v919
  %v1048 = vadd.f32 %v648, %v920
  %v1049 = vadd.f32 %v649, %v921
  %v1050 = vadd.f32 %v650, %v922
  %v1051 = vadd.f32 %v651, %v923
  %v1052 = vadd.f32 %v652, %v924
  %v1053 = vadd.f32 %v653, %v925
  %v1054 = vadd.f32 %v654, %v926
  %v1055 = vadd.f32 %v655, %v927
  %v1056 = vadd.f32 %v656, %v928
  %v1057 = vadd.f32 %v657, %v929
  %v1058 = vadd.f32 %v658, %v930
  %v1059 = vadd.f32 %v659, %v931
  %v1060 = vadd.f32 %v660, %v932
  %v1061 = vadd.f32 %v661, %v933
  %v1062 = vadd.f32 %v662, %v934
  %v1063 = vadd.f32 %v663, %v935
  %v1064 = vadd.f32 %v664, %v936
  %v1065 = vadd.f32 %v665, %v937
  %v1066 = vadd.f32 %v666, %v938
  %v1067 = vadd.f32 %v667, %v939
  %v1068 = vadd.f32 %v668, %v940
  %v1069 = vadd.f32 %v669, %v941
  %v1070 = vadd.f32 %v670, %v942
  %v1071 = vadd.f32 %v671, %v943
  %v1072 = vadd.f32 %v672, %v944
  %v1073 = vadd.f32 %v673, %v945
  %v1074 = vadd.f32 %v674, %v946
  %v1075 = vadd.f32 %v675, %v947
  %v1076 = vadd.f32 %v676, %v948
  %v1077 = vadd.f32 %v677, %v949
  %v1078 = vadd.f32 %v678, %v950
  %v1079 = vadd.f32 %v679, %v951
  %v1080 = vadd.f32 %v680, %v952
  %v1081 = vadd.f32 %v681, %v953
  %v1082 = vadd.f32 %v682, %v954
  %v1083 = vadd.f32 %v683, %v955
  %v1084 = vadd.f32 %v684, %v956
  %v1085 = vadd.f32 %v685, %v957
  %v1086 = vadd.f32 %v686, %v958
  %v1087 = vadd.f32 %v687, %v959
  %v1088 = vadd.f32 %v688, %v960
  %v1089 = vadd.f32 %v689, %v961
  %v1090 = vadd.f32 %v690, %v962
  %v1091 = vadd.f32 %v691, %v963
  %v1092 = vadd.f32 %v692, %v964
  %v1093 = vadd.f32 %v693, %v965
  %v1094 = vadd.f32 %v694, %v966
  %v1095 = vadd.f32 %v695, %v967
  %v1096 = vadd.f32 %v696, %v968
  %v1097 = vadd.f32 %v697, %v969
  %v1098 = vadd.f32 %v698, %v970
  %v1099 = vadd.f32 %v699, %v971
  %v1100 = vadd.f32 %v700, %v972
  %v1101 = vadd.f32 %v701, %v973
  %v1102 = vadd.f32 %v702, %v974
  %v1103 = vadd.f32 %v703, %v975
  %v1104 = vadd.f32 %v704, %v976
  %v1105 = vadd.f32 %v705, %v977
  %v1106 = vadd.f32 %v706, %v978
  %v1107 = vadd.f32 %v707, %v979
  %v1108 = vadd.f32 %v708, %v980
  %v1109 = vadd.f32 %v709, %v981
  %v1110 = vadd.f32 %v710, %v982
  %v1111 = vadd.f32 %v711, %v983
  %v1112 = vadd.f32 %v712, %v984
  %v1113 = vadd.f32 %v713, %v985
  %v1114 = vadd.f32 %v714, %v986
  %v1115 = vadd.f32 %v715, %v987
  %v1116 = vadd.f32 %v716, %v988
  %v1117 = vadd.f32 %v717, %v989
  %v1118 = vadd.f32 %v718, %v990
  %v1119 = vadd.f32 %v719, %v991
  %v1120 = vadd.f32 %v720, %v992
  %v1121 = vadd.f32 %v721, %v993
  %v1122 = vadd.f32 %v722, %v994
  %v1123 = vadd.f32 %v723, %v995
  %v1124 = vadd.f32 %v724, %v996
  %v1125 = vadd.f32 %v725, %v997
  %v1126 = vadd.f32 %v726, %v998
  %v1127 = vadd.f32 %v727, %v999
  %v1128 = vadd.f32 %v728, %v1000
  %v1129 = vadd.f32 %v729, %v1001
  %v1130 = vadd.f32 %v730, %v1002
  %v1131 = vadd.f32 %v731, %v1003
  %v1132 = vadd.f32 %v732, %v1004
  %v1133 = vadd.f32 %v733, %v1005
  %v1134 = vadd.f32 %v734, %v1006
  %v1135 = vadd.f32 %v735, %v1007
  %v1136 = vadd.f32 %v736, %v1008
  %v1137 = vadd.f32 %v737, %v1009
  %v1138 = vadd.f32 %v738, %v1010
  %v1139 = vadd.f32 %v739, %v1011
  %v1140 = vadd.f32 %v740, %v1012
  %v1141 = vadd.f32 %v741, %v1013
  %v1142 = vadd.f32 %v742, %v1014
  %v1143 = vadd.f32 %v743, %v1015
  %v1144 = vadd.f32 %v744, %v1016
  %v1145 = vadd.f32 %v745, %v1017
  %v1146 = vadd.f32 %v746, %v1018
  %v1147 = vadd.f32 %v747, %v1019
  %v1148 = vadd.f32 %v748, %v1020
  %v1149 = vadd.f32 %v749, %v1021
  %v1150 = vadd.f32 %v750, %v1022
  %1151 = vset.pattern.permute.xlu0 3
  %1152 = vperm.xlu0 %1151, %v11
  %v1153 = vpop.permute.xlu0 %1152
  %1155 = vset.pattern.permute.xlu0 3
  %1156 = vperm.xlu0 %1155, %v12
  %v1157 = vpop.permute.xlu0 %1156
  %1159 = vset.pattern.permute.xlu0 3
  %1160 = vperm.xlu0 %1159, %v13
  %v1161 = vpop.permute.xlu0 %1160
  %1163 = vset.pattern.permute.xlu0 3
  %1164 = vperm.xlu0 %1163, %v14
  %v1165 = vpop.permute.xlu0 %1164
  %1167 = vset.pattern.permute.xlu0 3
  %1168 = vperm.xlu0 %1167, %v15
  %v1169 = vpop.permute.xlu0 %1168
  %1171 = vset.pattern.permute.xlu0 3
  %1172 = vperm.xlu0 %1171, %v16
  %v1173 = vpop.permute.xlu0 %1172
  %1175 = vset.pattern.permute.xlu0 3
  %1176 = vperm.xlu0 %1175, %v17
  %v1177 = vpop.permute.xlu0 %1176
  %1179 = vset.pattern.permute.xlu0 3
  %1180 = vperm.xlu0 %1179, %v18
  %v1181 = vpop.permute.xlu0 %1180
  %1183 = vset.pattern.permute.xlu0 3
  %1184 = vperm.xlu0 %1183, %v19
  %v1185 = vpop.permute.xlu0 %1184
  %1187 = vset.pattern.permute.xlu0 3
  %1188 = vperm.xlu0 %1187, %v20
  %v1189 = vpop.permute.xlu0 %1188
  %1191 = vset.pattern.permute.xlu0 3
  %1192 = vperm.xlu0 %1191, %v21
  %v1193 = vpop.permute.xlu0 %1192
  %1195 = vset.pattern.permute.xlu0 3
  %1196 = vperm.xlu0 %1195, %v22
  %v1197 = vpop.permute.xlu0 %1196
  %1199 = vset.pattern.permute.xlu0 3
  %1200 = vperm.xlu0 %1199, %v23
  %v1201 = vpop.permute.xlu0 %1200
  %1203 = vset.pattern.permute.xlu0 3
  %1204 = vperm.xlu0 %1203, %v24
  %v1205 = vpop.permute.xlu0 %1204
  %1207 = vset.pattern.permute.xlu0 3
  %1208 = vperm.xlu0 %1207, %v25
  %v1209 = vpop.permute.xlu0 %1208
  %1211 = vset.pattern.permute.xlu0 3
  %1212 = vperm.xlu0 %1211, %v26
  %v1213 = vpop.permute.xlu0 %1212
  %1215 = vset.pattern.permute.xlu0 3
  %1216 = vperm.xlu0 %1215, %v27
  %v1217 = vpop.permute.xlu0 %1216
  %1219 = vset.pattern.permute.xlu0 3
  %1220 = vperm.xlu0 %1219, %v28
  %v1221 = vpop.permute.xlu0 %1220
  %1223 = vset.pattern.permute.xlu0 3
  %1224 = vperm.xlu0 %1223, %v29
  %v1225 = vpop.permute.xlu0 %1224
  %1227 = vset.pattern.permute.xlu0 3
  %1228 = vperm.xlu0 %1227, %v30
  %v1229 = vpop.permute.xlu0 %1228
  %1231 = vset.pattern.permute.xlu0 3
  %1232 = vperm.xlu0 %1231, %v31
  %v1233 = vpop.permute.xlu0 %1232
  %1235 = vset.pattern.permute.xlu0 3
  %1236 = vperm.xlu0 %1235, %v32
  %v1237 = vpop.permute.xlu0 %1236
  %1239 = vset.pattern.permute.xlu0 3
  %1240 = vperm.xlu0 %1239, %v33
  %v1241 = vpop.permute.xlu0 %1240
  %1243 = vset.pattern.permute.xlu0 3
  %1244 = vperm.xlu0 %1243, %v34
  %v1245 = vpop.permute.xlu0 %1244
  %1247 = vset.pattern.permute.xlu0 3
  %1248 = vperm.xlu0 %1247, %v35
  %v1249 = vpop.permute.xlu0 %1248
  %1251 = vset.pattern.permute.xlu0 3
  %1252 = vperm.xlu0 %1251, %v36
  %v1253 = vpop.permute.xlu0 %1252
  %1255 = vset.pattern.permute.xlu0 3
  %1256 = vperm.xlu0 %1255, %v37
  %v1257 = vpop.permute.xlu0 %1256
  %1259 = vset.pattern.permute.xlu0 3
  %1260 = vperm.xlu0 %1259, %v38
  %v1261 = vpop.permute.xlu0 %1260
  %1263 = vset.pattern.permute.xlu0 3
  %1264 = vperm.xlu0 %1263, %v39
  %v1265 = vpop.permute.xlu0 %1264
  %1267 = vset.pattern.permute.xlu0 3
  %1268 = vperm.xlu0 %1267, %v40
  %v1269 = vpop.permute.xlu0 %1268
  %1271 = vset.pattern.permute.xlu0 3
  %1272 = vperm.xlu0 %1271, %v41
  %v1273 = vpop.permute.xlu0 %1272
  %1275 = vset.pattern.permute.xlu0 3
  %1276 = vperm.xlu0 %1275, %v42
  %v1277 = vpop.permute.xlu0 %1276
  %v1279 = vlaneseq
  %v1280 = vshrl.u32 %v1279, 7
  %v1281 = vsub.s32 3, %v1280
  %v1282 = vrot.slane %v43, %v1281
  %v1283 = vlaneseq
  %v1284 = vshrl.u32 %v1283, 7
  %v1285 = vsub.s32 3, %v1284
  %v1286 = vrot.slane %v44, %v1285
  %v1287 = vlaneseq
  %v1288 = vshrl.u32 %v1287, 7
  %v1289 = vsub.s32 3, %v1288
  %v1290 = vrot.slane %v45, %v1289
  %v1291 = vlaneseq
  %v1292 = vshrl.u32 %v1291, 7
  %v1293 = vsub.s32 3, %v1292
  %v1294 = vrot.slane %v46, %v1293
  %v1295 = vmul.f32 %v1153, %v1282
  %v1296 = vmul.f32 %v1153, %v1286
  %v1297 = vmul.f32 %v1153, %v1290
  %v1298 = vmul.f32 %v1153, %v1294
  %v1299 = vmul.f32 %v1157, %v1282
  %v1300 = vmul.f32 %v1157, %v1286
  %v1301 = vmul.f32 %v1157, %v1290
  %v1302 = vmul.f32 %v1157, %v1294
  %v1303 = vmul.f32 %v1161, %v1282
  %v1304 = vmul.f32 %v1161, %v1286
  %v1305 = vmul.f32 %v1161, %v1290
  %v1306 = vmul.f32 %v1161, %v1294
  %v1307 = vmul.f32 %v1165, %v1282
  %v1308 = vmul.f32 %v1165, %v1286
  %v1309 = vmul.f32 %v1165, %v1290
  %v1310 = vmul.f32 %v1165, %v1294
  %v1311 = vmul.f32 %v1169, %v1282
  %v1312 = vmul.f32 %v1169, %v1286
  %v1313 = vmul.f32 %v1169, %v1290
  %v1314 = vmul.f32 %v1169, %v1294
  %v1315 = vmul.f32 %v1173, %v1282
  %v1316 = vmul.f32 %v1173, %v1286
  %v1317 = vmul.f32 %v1173, %v1290
  %v1318 = vmul.f32 %v1173, %v1294
  %v1319 = vmul.f32 %v1177, %v1282
  %v1320 = vmul.f32 %v1177, %v1286
  %v1321 = vmul.f32 %v1177, %v1290
  %v1322 = vmul.f32 %v1177, %v1294
  %v1323 = vmul.f32 %v1181, %v1282
  %v1324 = vmul.f32 %v1181, %v1286
  %v1325 = vmul.f32 %v1181, %v1290
  %v1326 = vmul.f32 %v1181, %v1294
  %v1327 = vmul.f32 %v1185, %v1282
  %v1328 = vmul.f32 %v1185, %v1286
  %v1329 = vmul.f32 %v1185, %v1290
  %v1330 = vmul.f32 %v1185, %v1294
  %v1331 = vmul.f32 %v1189, %v1282
  %v1332 = vmul.f32 %v1189, %v1286
  %v1333 = vmul.f32 %v1189, %v1290
  %v1334 = vmul.f32 %v1189, %v1294
  %v1335 = vmul.f32 %v1193, %v1282
  %v1336 = vmul.f32 %v1193, %v1286
  %v1337 = vmul.f32 %v1193, %v1290
  %v1338 = vmul.f32 %v1193, %v1294
  %v1339 = vmul.f32 %v1197, %v1282
  %v1340 = vmul.f32 %v1197, %v1286
  %v1341 = vmul.f32 %v1197, %v1290
  %v1342 = vmul.f32 %v1197, %v1294
  %v1343 = vmul.f32 %v1201, %v1282
  %v1344 = vmul.f32 %v1201, %v1286
  %v1345 = vmul.f32 %v1201, %v1290
  %v1346 = vmul.f32 %v1201, %v1294
  %v1347 = vmul.f32 %v1205, %v1282
  %v1348 = vmul.f32 %v1205, %v1286
  %v1349 = vmul.f32 %v1205, %v1290
  %v1350 = vmul.f32 %v1205, %v1294
  %v1351 = vmul.f32 %v1209, %v1282
  %v1352 = vmul.f32 %v1209, %v1286
  %v1353 = vmul.f32 %v1209, %v1290
  %v1354 = vmul.f32 %v1209, %v1294
  %v1355 = vmul.f32 %v1213, %v1282
  %v1356 = vmul.f32 %v1213, %v1286
  %v1357 = vmul.f32 %v1213, %v1290
  %v1358 = vmul.f32 %v1213, %v1294
  %v1359 = vmul.f32 %v1217, %v1282
  %v1360 = vmul.f32 %v1217, %v1286
  %v1361 = vmul.f32 %v1217, %v1290
  %v1362 = vmul.f32 %v1217, %v1294
  %v1363 = vmul.f32 %v1221, %v1282
  %v1364 = vmul.f32 %v1221, %v1286
  %v1365 = vmul.f32 %v1221, %v1290
  %v1366 = vmul.f32 %v1221, %v1294
  %v1367 = vmul.f32 %v1225, %v1282
  %v1368 = vmul.f32 %v1225, %v1286
  %v1369 = vmul.f32 %v1225, %v1290
  %v1370 = vmul.f32 %v1225, %v1294
  %v1371 = vmul.f32 %v1229, %v1282
  %v1372 = vmul.f32 %v1229, %v1286
  %v1373 = vmul.f32 %v1229, %v1290
  %v1374 = vmul.f32 %v1229, %v1294
  %v1375 = vmul.f32 %v1233, %v1282
  %v1376 = vmul.f32 %v1233, %v1286
  %v1377 = vmul.f32 %v1233, %v1290
  %v1378 = vmul.f32 %v1233, %v1294
  %v1379 = vmul.f32 %v1237, %v1282
  %v1380 = vmul.f32 %v1237, %v1286
  %v1381 = vmul.f32 %v1237, %v1290
  %v1382 = vmul.f32 %v1237, %v1294
  %v1383 = vmul.f32 %v1241, %v1282
  %v1384 = vmul.f32 %v1241, %v1286
  %v1385 = vmul.f32 %v1241, %v1290
  %v1386 = vmul.f32 %v1241, %v1294
  %v1387 = vmul.f32 %v1245, %v1282
  %v1388 = vmul.f32 %v1245, %v1286
  %v1389 = vmul.f32 %v1245, %v1290
  %v1390 = vmul.f32 %v1245, %v1294
  %v1391 = vmul.f32 %v1249, %v1282
  %v1392 = vmul.f32 %v1249, %v1286
  %v1393 = vmul.f32 %v1249, %v1290
  %v1394 = vmul.f32 %v1249, %v1294
  %v1395 = vmul.f32 %v1253, %v1282
  %v1396 = vmul.f32 %v1253, %v1286
  %v1397 = vmul.f32 %v1253, %v1290
  %v1398 = vmul.f32 %v1253, %v1294
  %v1399 = vmul.f32 %v1257, %v1282
  %v1400 = vmul.f32 %v1257, %v1286
  %v1401 = vmul.f32 %v1257, %v1290
  %v1402 = vmul.f32 %v1257, %v1294
  %v1403 = vmul.f32 %v1261, %v1282
  %v1404 = vmul.f32 %v1261, %v1286
  %v1405 = vmul.f32 %v1261, %v1290
  %v1406 = vmul.f32 %v1261, %v1294
  %v1407 = vmul.f32 %v1265, %v1282
  %v1408 = vmul.f32 %v1265, %v1286
  %v1409 = vmul.f32 %v1265, %v1290
  %v1410 = vmul.f32 %v1265, %v1294
  %v1411 = vmul.f32 %v1269, %v1282
  %v1412 = vmul.f32 %v1269, %v1286
  %v1413 = vmul.f32 %v1269, %v1290
  %v1414 = vmul.f32 %v1269, %v1294
  %v1415 = vmul.f32 %v1273, %v1282
  %v1416 = vmul.f32 %v1273, %v1286
  %v1417 = vmul.f32 %v1273, %v1290
  %v1418 = vmul.f32 %v1273, %v1294
  %v1419 = vmul.f32 %v1277, %v1282
  %v1420 = vmul.f32 %v1277, %v1286
  %v1421 = vmul.f32 %v1277, %v1290
  %v1422 = vmul.f32 %v1277, %v1294
  %v1423 = vadd.f32 %v1023, %v1295
  %v1424 = vadd.f32 %v1024, %v1296
  %v1425 = vadd.f32 %v1025, %v1297
  %v1426 = vadd.f32 %v1026, %v1298
  %v1427 = vadd.f32 %v1027, %v1299
  %v1428 = vadd.f32 %v1028, %v1300
  %v1429 = vadd.f32 %v1029, %v1301
  %v1430 = vadd.f32 %v1030, %v1302
  %v1431 = vadd.f32 %v1031, %v1303
  %v1432 = vadd.f32 %v1032, %v1304
  %v1433 = vadd.f32 %v1033, %v1305
  %v1434 = vadd.f32 %v1034, %v1306
  %v1435 = vadd.f32 %v1035, %v1307
  %v1436 = vadd.f32 %v1036, %v1308
  %v1437 = vadd.f32 %v1037, %v1309
  %v1438 = vadd.f32 %v1038, %v1310
  %v1439 = vadd.f32 %v1039, %v1311
  %v1440 = vadd.f32 %v1040, %v1312
  %v1441 = vadd.f32 %v1041, %v1313
  %v1442 = vadd.f32 %v1042, %v1314
  %v1443 = vadd.f32 %v1043, %v1315
  %v1444 = vadd.f32 %v1044, %v1316
  %v1445 = vadd.f32 %v1045, %v1317
  %v1446 = vadd.f32 %v1046, %v1318
  %v1447 = vadd.f32 %v1047, %v1319
  %v1448 = vadd.f32 %v1048, %v1320
  %v1449 = vadd.f32 %v1049, %v1321
  %v1450 = vadd.f32 %v1050, %v1322
  %v1451 = vadd.f32 %v1051, %v1323
  %v1452 = vadd.f32 %v1052, %v1324
  %v1453 = vadd.f32 %v1053, %v1325
  %v1454 = vadd.f32 %v1054, %v1326
  %v1455 = vadd.f32 %v1055, %v1327
  %v1456 = vadd.f32 %v1056, %v1328
  %v1457 = vadd.f32 %v1057, %v1329
  %v1458 = vadd.f32 %v1058, %v1330
  %v1459 = vadd.f32 %v1059, %v1331
  %v1460 = vadd.f32 %v1060, %v1332
  %v1461 = vadd.f32 %v1061, %v1333
  %v1462 = vadd.f32 %v1062, %v1334
  %v1463 = vadd.f32 %v1063, %v1335
  %v1464 = vadd.f32 %v1064, %v1336
  %v1465 = vadd.f32 %v1065, %v1337
  %v1466 = vadd.f32 %v1066, %v1338
  %v1467 = vadd.f32 %v1067, %v1339
  %v1468 = vadd.f32 %v1068, %v1340
  %v1469 = vadd.f32 %v1069, %v1341
  %v1470 = vadd.f32 %v1070, %v1342
  %v1471 = vadd.f32 %v1071, %v1343
  %v1472 = vadd.f32 %v1072, %v1344
  %v1473 = vadd.f32 %v1073, %v1345
  %v1474 = vadd.f32 %v1074, %v1346
  %v1475 = vadd.f32 %v1075, %v1347
  %v1476 = vadd.f32 %v1076, %v1348
  %v1477 = vadd.f32 %v1077, %v1349
  %v1478 = vadd.f32 %v1078, %v1350
  %v1479 = vadd.f32 %v1079, %v1351
  %v1480 = vadd.f32 %v1080, %v1352
  %v1481 = vadd.f32 %v1081, %v1353
  %v1482 = vadd.f32 %v1082, %v1354
  %v1483 = vadd.f32 %v1083, %v1355
  %v1484 = vadd.f32 %v1084, %v1356
  %v1485 = vadd.f32 %v1085, %v1357
  %v1486 = vadd.f32 %v1086, %v1358
  %v1487 = vadd.f32 %v1087, %v1359
  %v1488 = vadd.f32 %v1088, %v1360
  %v1489 = vadd.f32 %v1089, %v1361
  %v1490 = vadd.f32 %v1090, %v1362
  %v1491 = vadd.f32 %v1091, %v1363
  %v1492 = vadd.f32 %v1092, %v1364
  %v1493 = vadd.f32 %v1093, %v1365
  %v1494 = vadd.f32 %v1094, %v1366
  %v1495 = vadd.f32 %v1095, %v1367
  %v1496 = vadd.f32 %v1096, %v1368
  %v1497 = vadd.f32 %v1097, %v1369
  %v1498 = vadd.f32 %v1098, %v1370
  %v1499 = vadd.f32 %v1099, %v1371
  %v1500 = vadd.f32 %v1100, %v1372
  %v1501 = vadd.f32 %v1101, %v1373
  %v1502 = vadd.f32 %v1102, %v1374
  %v1503 = vadd.f32 %v1103, %v1375
  %v1504 = vadd.f32 %v1104, %v1376
  %v1505 = vadd.f32 %v1105, %v1377
  %v1506 = vadd.f32 %v1106, %v1378
  %v1507 = vadd.f32 %v1107, %v1379
  %v1508 = vadd.f32 %v1108, %v1380
  %v1509 = vadd.f32 %v1109, %v1381
  %v1510 = vadd.f32 %v1110, %v1382
  %v1511 = vadd.f32 %v1111, %v1383
  %v1512 = vadd.f32 %v1112, %v1384
  %v1513 = vadd.f32 %v1113, %v1385
  %v1514 = vadd.f32 %v1114, %v1386
  %v1515 = vadd.f32 %v1115, %v1387
  %v1516 = vadd.f32 %v1116, %v1388
  %v1517 = vadd.f32 %v1117, %v1389
  %v1518 = vadd.f32 %v1118, %v1390
  %v1519 = vadd.f32 %v1119, %v1391
  %v1520 = vadd.f32 %v1120, %v1392
  %v1521 = vadd.f32 %v1121, %v1393
  %v1522 = vadd.f32 %v1122, %v1394
  %v1523 = vadd.f32 %v1123, %v1395
  %v1524 = vadd.f32 %v1124, %v1396
  %v1525 = vadd.f32 %v1125, %v1397
  %v1526 = vadd.f32 %v1126, %v1398
  %v1527 = vadd.f32 %v1127, %v1399
  %v1528 = vadd.f32 %v1128, %v1400
  %v1529 = vadd.f32 %v1129, %v1401
  %v1530 = vadd.f32 %v1130, %v1402
  %v1531 = vadd.f32 %v1131, %v1403
  %v1532 = vadd.f32 %v1132, %v1404
  %v1533 = vadd.f32 %v1133, %v1405
  %v1534 = vadd.f32 %v1134, %v1406
  %v1535 = vadd.f32 %v1135, %v1407
  %v1536 = vadd.f32 %v1136, %v1408
  %v1537 = vadd.f32 %v1137, %v1409
  %v1538 = vadd.f32 %v1138, %v1410
  %v1539 = vadd.f32 %v1139, %v1411
  %v1540 = vadd.f32 %v1140, %v1412
  %v1541 = vadd.f32 %v1141, %v1413
  %v1542 = vadd.f32 %v1142, %v1414
  %v1543 = vadd.f32 %v1143, %v1415
  %v1544 = vadd.f32 %v1144, %v1416
  %v1545 = vadd.f32 %v1145, %v1417
  %v1546 = vadd.f32 %v1146, %v1418
  %v1547 = vadd.f32 %v1147, %v1419
  %v1548 = vadd.f32 %v1148, %v1420
  %v1549 = vadd.f32 %v1149, %v1421
  %v1550 = vadd.f32 %v1150, %v1422
  %1551 = vset.pattern.permute.xlu0 4
  %1552 = vperm.xlu0 %1551, %v11
  %v1553 = vpop.permute.xlu0 %1552
  %1555 = vset.pattern.permute.xlu0 4
  %1556 = vperm.xlu0 %1555, %v12
  %v1557 = vpop.permute.xlu0 %1556
  %1559 = vset.pattern.permute.xlu0 4
  %1560 = vperm.xlu0 %1559, %v13
  %v1561 = vpop.permute.xlu0 %1560
  %1563 = vset.pattern.permute.xlu0 4
  %1564 = vperm.xlu0 %1563, %v14
  %v1565 = vpop.permute.xlu0 %1564
  %1567 = vset.pattern.permute.xlu0 4
  %1568 = vperm.xlu0 %1567, %v15
  %v1569 = vpop.permute.xlu0 %1568
  %1571 = vset.pattern.permute.xlu0 4
  %1572 = vperm.xlu0 %1571, %v16
  %v1573 = vpop.permute.xlu0 %1572
  %1575 = vset.pattern.permute.xlu0 4
  %1576 = vperm.xlu0 %1575, %v17
  %v1577 = vpop.permute.xlu0 %1576
  %1579 = vset.pattern.permute.xlu0 4
  %1580 = vperm.xlu0 %1579, %v18
  %v1581 = vpop.permute.xlu0 %1580
  %1583 = vset.pattern.permute.xlu0 4
  %1584 = vperm.xlu0 %1583, %v19
  %v1585 = vpop.permute.xlu0 %1584
  %1587 = vset.pattern.permute.xlu0 4
  %1588 = vperm.xlu0 %1587, %v20
  %v1589 = vpop.permute.xlu0 %1588
  %1591 = vset.pattern.permute.xlu0 4
  %1592 = vperm.xlu0 %1591, %v21
  %v1593 = vpop.permute.xlu0 %1592
  %1595 = vset.pattern.permute.xlu0 4
  %1596 = vperm.xlu0 %1595, %v22
  %v1597 = vpop.permute.xlu0 %1596
  %1599 = vset.pattern.permute.xlu0 4
  %1600 = vperm.xlu0 %1599, %v23
  %v1601 = vpop.permute.xlu0 %1600
  %1603 = vset.pattern.permute.xlu0 4
  %1604 = vperm.xlu0 %1603, %v24
  %v1605 = vpop.permute.xlu0 %1604
  %1607 = vset.pattern.permute.xlu0 4
  %1608 = vperm.xlu0 %1607, %v25
  %v1609 = vpop.permute.xlu0 %1608
  %1611 = vset.pattern.permute.xlu0 4
  %1612 = vperm.xlu0 %1611, %v26
  %v1613 = vpop.permute.xlu0 %1612
  %1615 = vset.pattern.permute.xlu0 4
  %1616 = vperm.xlu0 %1615, %v27
  %v1617 = vpop.permute.xlu0 %1616
  %1619 = vset.pattern.permute.xlu0 4
  %1620 = vperm.xlu0 %1619, %v28
  %v1621 = vpop.permute.xlu0 %1620
  %1623 = vset.pattern.permute.xlu0 4
  %1624 = vperm.xlu0 %1623, %v29
  %v1625 = vpop.permute.xlu0 %1624
  %1627 = vset.pattern.permute.xlu0 4
  %1628 = vperm.xlu0 %1627, %v30
  %v1629 = vpop.permute.xlu0 %1628
  %1631 = vset.pattern.permute.xlu0 4
  %1632 = vperm.xlu0 %1631, %v31
  %v1633 = vpop.permute.xlu0 %1632
  %1635 = vset.pattern.permute.xlu0 4
  %1636 = vperm.xlu0 %1635, %v32
  %v1637 = vpop.permute.xlu0 %1636
  %1639 = vset.pattern.permute.xlu0 4
  %1640 = vperm.xlu0 %1639, %v33
  %v1641 = vpop.permute.xlu0 %1640
  %1643 = vset.pattern.permute.xlu0 4
  %1644 = vperm.xlu0 %1643, %v34
  %v1645 = vpop.permute.xlu0 %1644
  %1647 = vset.pattern.permute.xlu0 4
  %1648 = vperm.xlu0 %1647, %v35
  %v1649 = vpop.permute.xlu0 %1648
  %1651 = vset.pattern.permute.xlu0 4
  %1652 = vperm.xlu0 %1651, %v36
  %v1653 = vpop.permute.xlu0 %1652
  %1655 = vset.pattern.permute.xlu0 4
  %1656 = vperm.xlu0 %1655, %v37
  %v1657 = vpop.permute.xlu0 %1656
  %1659 = vset.pattern.permute.xlu0 4
  %1660 = vperm.xlu0 %1659, %v38
  %v1661 = vpop.permute.xlu0 %1660
  %1663 = vset.pattern.permute.xlu0 4
  %1664 = vperm.xlu0 %1663, %v39
  %v1665 = vpop.permute.xlu0 %1664
  %1667 = vset.pattern.permute.xlu0 4
  %1668 = vperm.xlu0 %1667, %v40
  %v1669 = vpop.permute.xlu0 %1668
  %1671 = vset.pattern.permute.xlu0 4
  %1672 = vperm.xlu0 %1671, %v41
  %v1673 = vpop.permute.xlu0 %1672
  %1675 = vset.pattern.permute.xlu0 4
  %1676 = vperm.xlu0 %1675, %v42
  %v1677 = vpop.permute.xlu0 %1676
  %v1679 = vlaneseq
  %v1680 = vshrl.u32 %v1679, 7
  %v1681 = vsub.s32 4, %v1680
  %v1682 = vrot.slane %v43, %v1681
  %v1683 = vlaneseq
  %v1684 = vshrl.u32 %v1683, 7
  %v1685 = vsub.s32 4, %v1684
  %v1686 = vrot.slane %v44, %v1685
  %v1687 = vlaneseq
  %v1688 = vshrl.u32 %v1687, 7
  %v1689 = vsub.s32 4, %v1688
  %v1690 = vrot.slane %v45, %v1689
  %v1691 = vlaneseq
  %v1692 = vshrl.u32 %v1691, 7
  %v1693 = vsub.s32 4, %v1692
  %v1694 = vrot.slane %v46, %v1693
  %v1695 = vmul.f32 %v1553, %v1682
  %v1696 = vmul.f32 %v1553, %v1686
  %v1697 = vmul.f32 %v1553, %v1690
  %v1698 = vmul.f32 %v1553, %v1694
  %v1699 = vmul.f32 %v1557, %v1682
  %v1700 = vmul.f32 %v1557, %v1686
  %v1701 = vmul.f32 %v1557, %v1690
  %v1702 = vmul.f32 %v1557, %v1694
  %v1703 = vmul.f32 %v1561, %v1682
  %v1704 = vmul.f32 %v1561, %v1686
  %v1705 = vmul.f32 %v1561, %v1690
  %v1706 = vmul.f32 %v1561, %v1694
  %v1707 = vmul.f32 %v1565, %v1682
  %v1708 = vmul.f32 %v1565, %v1686
  %v1709 = vmul.f32 %v1565, %v1690
  %v1710 = vmul.f32 %v1565, %v1694
  %v1711 = vmul.f32 %v1569, %v1682
  %v1712 = vmul.f32 %v1569, %v1686
  %v1713 = vmul.f32 %v1569, %v1690
  %v1714 = vmul.f32 %v1569, %v1694
  %v1715 = vmul.f32 %v1573, %v1682
  %v1716 = vmul.f32 %v1573, %v1686
  %v1717 = vmul.f32 %v1573, %v1690
  %v1718 = vmul.f32 %v1573, %v1694
  %v1719 = vmul.f32 %v1577, %v1682
  %v1720 = vmul.f32 %v1577, %v1686
  %v1721 = vmul.f32 %v1577, %v1690
  %v1722 = vmul.f32 %v1577, %v1694
  %v1723 = vmul.f32 %v1581, %v1682
  %v1724 = vmul.f32 %v1581, %v1686
  %v1725 = vmul.f32 %v1581, %v1690
  %v1726 = vmul.f32 %v1581, %v1694
  %v1727 = vmul.f32 %v1585, %v1682
  %v1728 = vmul.f32 %v1585, %v1686
  %v1729 = vmul.f32 %v1585, %v1690
  %v1730 = vmul.f32 %v1585, %v1694
  %v1731 = vmul.f32 %v1589, %v1682
  %v1732 = vmul.f32 %v1589, %v1686
  %v1733 = vmul.f32 %v1589, %v1690
  %v1734 = vmul.f32 %v1589, %v1694
  %v1735 = vmul.f32 %v1593, %v1682
  %v1736 = vmul.f32 %v1593, %v1686
  %v1737 = vmul.f32 %v1593, %v1690
  %v1738 = vmul.f32 %v1593, %v1694
  %v1739 = vmul.f32 %v1597, %v1682
  %v1740 = vmul.f32 %v1597, %v1686
  %v1741 = vmul.f32 %v1597, %v1690
  %v1742 = vmul.f32 %v1597, %v1694
  %v1743 = vmul.f32 %v1601, %v1682
  %v1744 = vmul.f32 %v1601, %v1686
  %v1745 = vmul.f32 %v1601, %v1690
  %v1746 = vmul.f32 %v1601, %v1694
  %v1747 = vmul.f32 %v1605, %v1682
  %v1748 = vmul.f32 %v1605, %v1686
  %v1749 = vmul.f32 %v1605, %v1690
  %v1750 = vmul.f32 %v1605, %v1694
  %v1751 = vmul.f32 %v1609, %v1682
  %v1752 = vmul.f32 %v1609, %v1686
  %v1753 = vmul.f32 %v1609, %v1690
  %v1754 = vmul.f32 %v1609, %v1694
  %v1755 = vmul.f32 %v1613, %v1682
  %v1756 = vmul.f32 %v1613, %v1686
  %v1757 = vmul.f32 %v1613, %v1690
  %v1758 = vmul.f32 %v1613, %v1694
  %v1759 = vmul.f32 %v1617, %v1682
  %v1760 = vmul.f32 %v1617, %v1686
  %v1761 = vmul.f32 %v1617, %v1690
  %v1762 = vmul.f32 %v1617, %v1694
  %v1763 = vmul.f32 %v1621, %v1682
  %v1764 = vmul.f32 %v1621, %v1686
  %v1765 = vmul.f32 %v1621, %v1690
  %v1766 = vmul.f32 %v1621, %v1694
  %v1767 = vmul.f32 %v1625, %v1682
  %v1768 = vmul.f32 %v1625, %v1686
  %v1769 = vmul.f32 %v1625, %v1690
  %v1770 = vmul.f32 %v1625, %v1694
  %v1771 = vmul.f32 %v1629, %v1682
  %v1772 = vmul.f32 %v1629, %v1686
  %v1773 = vmul.f32 %v1629, %v1690
  %v1774 = vmul.f32 %v1629, %v1694
  %v1775 = vmul.f32 %v1633, %v1682
  %v1776 = vmul.f32 %v1633, %v1686
  %v1777 = vmul.f32 %v1633, %v1690
  %v1778 = vmul.f32 %v1633, %v1694
  %v1779 = vmul.f32 %v1637, %v1682
  %v1780 = vmul.f32 %v1637, %v1686
  %v1781 = vmul.f32 %v1637, %v1690
  %v1782 = vmul.f32 %v1637, %v1694
  %v1783 = vmul.f32 %v1641, %v1682
  %v1784 = vmul.f32 %v1641, %v1686
  %v1785 = vmul.f32 %v1641, %v1690
  %v1786 = vmul.f32 %v1641, %v1694
  %v1787 = vmul.f32 %v1645, %v1682
  %v1788 = vmul.f32 %v1645, %v1686
  %v1789 = vmul.f32 %v1645, %v1690
  %v1790 = vmul.f32 %v1645, %v1694
  %v1791 = vmul.f32 %v1649, %v1682
  %v1792 = vmul.f32 %v1649, %v1686
  %v1793 = vmul.f32 %v1649, %v1690
  %v1794 = vmul.f32 %v1649, %v1694
  %v1795 = vmul.f32 %v1653, %v1682
  %v1796 = vmul.f32 %v1653, %v1686
  %v1797 = vmul.f32 %v1653, %v1690
  %v1798 = vmul.f32 %v1653, %v1694
  %v1799 = vmul.f32 %v1657, %v1682
  %v1800 = vmul.f32 %v1657, %v1686
  %v1801 = vmul.f32 %v1657, %v1690
  %v1802 = vmul.f32 %v1657, %v1694
  %v1803 = vmul.f32 %v1661, %v1682
  %v1804 = vmul.f32 %v1661, %v1686
  %v1805 = vmul.f32 %v1661, %v1690
  %v1806 = vmul.f32 %v1661, %v1694
  %v1807 = vmul.f32 %v1665, %v1682
  %v1808 = vmul.f32 %v1665, %v1686
  %v1809 = vmul.f32 %v1665, %v1690
  %v1810 = vmul.f32 %v1665, %v1694
  %v1811 = vmul.f32 %v1669, %v1682
  %v1812 = vmul.f32 %v1669, %v1686
  %v1813 = vmul.f32 %v1669, %v1690
  %v1814 = vmul.f32 %v1669, %v1694
  %v1815 = vmul.f32 %v1673, %v1682
  %v1816 = vmul.f32 %v1673, %v1686
  %v1817 = vmul.f32 %v1673, %v1690
  %v1818 = vmul.f32 %v1673, %v1694
  %v1819 = vmul.f32 %v1677, %v1682
  %v1820 = vmul.f32 %v1677, %v1686
  %v1821 = vmul.f32 %v1677, %v1690
  %v1822 = vmul.f32 %v1677, %v1694
  %v1823 = vadd.f32 %v1423, %v1695
  %v1824 = vadd.f32 %v1424, %v1696
  %v1825 = vadd.f32 %v1425, %v1697
  %v1826 = vadd.f32 %v1426, %v1698
  %v1827 = vadd.f32 %v1427, %v1699
  %v1828 = vadd.f32 %v1428, %v1700
  %v1829 = vadd.f32 %v1429, %v1701
  %v1830 = vadd.f32 %v1430, %v1702
  %v1831 = vadd.f32 %v1431, %v1703
  %v1832 = vadd.f32 %v1432, %v1704
  %v1833 = vadd.f32 %v1433, %v1705
  %v1834 = vadd.f32 %v1434, %v1706
  %v1835 = vadd.f32 %v1435, %v1707
  %v1836 = vadd.f32 %v1436, %v1708
  %v1837 = vadd.f32 %v1437, %v1709
  %v1838 = vadd.f32 %v1438, %v1710
  %v1839 = vadd.f32 %v1439, %v1711
  %v1840 = vadd.f32 %v1440, %v1712
  %v1841 = vadd.f32 %v1441, %v1713
  %v1842 = vadd.f32 %v1442, %v1714
  %v1843 = vadd.f32 %v1443, %v1715
  %v1844 = vadd.f32 %v1444, %v1716
  %v1845 = vadd.f32 %v1445, %v1717
  %v1846 = vadd.f32 %v1446, %v1718
  %v1847 = vadd.f32 %v1447, %v1719
  %v1848 = vadd.f32 %v1448, %v1720
  %v1849 = vadd.f32 %v1449, %v1721
  %v1850 = vadd.f32 %v1450, %v1722
  %v1851 = vadd.f32 %v1451, %v1723
  %v1852 = vadd.f32 %v1452, %v1724
  %v1853 = vadd.f32 %v1453, %v1725
  %v1854 = vadd.f32 %v1454, %v1726
  %v1855 = vadd.f32 %v1455, %v1727
  %v1856 = vadd.f32 %v1456, %v1728
  %v1857 = vadd.f32 %v1457, %v1729
  %v1858 = vadd.f32 %v1458, %v1730
  %v1859 = vadd.f32 %v1459, %v1731
  %v1860 = vadd.f32 %v1460, %v1732
  %v1861 = vadd.f32 %v1461, %v1733
  %v1862 = vadd.f32 %v1462, %v1734
  %v1863 = vadd.f32 %v1463, %v1735
  %v1864 = vadd.f32 %v1464, %v1736
  %v1865 = vadd.f32 %v1465, %v1737
  %v1866 = vadd.f32 %v1466, %v1738
  %v1867 = vadd.f32 %v1467, %v1739
  %v1868 = vadd.f32 %v1468, %v1740
  %v1869 = vadd.f32 %v1469, %v1741
  %v1870 = vadd.f32 %v1470, %v1742
  %v1871 = vadd.f32 %v1471, %v1743
  %v1872 = vadd.f32 %v1472, %v1744
  %v1873 = vadd.f32 %v1473, %v1745
  %v1874 = vadd.f32 %v1474, %v1746
  %v1875 = vadd.f32 %v1475, %v1747
  %v1876 = vadd.f32 %v1476, %v1748
  %v1877 = vadd.f32 %v1477, %v1749
  %v1878 = vadd.f32 %v1478, %v1750
  %v1879 = vadd.f32 %v1479, %v1751
  %v1880 = vadd.f32 %v1480, %v1752
  %v1881 = vadd.f32 %v1481, %v1753
  %v1882 = vadd.f32 %v1482, %v1754
  %v1883 = vadd.f32 %v1483, %v1755
  %v1884 = vadd.f32 %v1484, %v1756
  %v1885 = vadd.f32 %v1485, %v1757
  %v1886 = vadd.f32 %v1486, %v1758
  %v1887 = vadd.f32 %v1487, %v1759
  %v1888 = vadd.f32 %v1488, %v1760
  %v1889 = vadd.f32 %v1489, %v1761
  %v1890 = vadd.f32 %v1490, %v1762
  %v1891 = vadd.f32 %v1491, %v1763
  %v1892 = vadd.f32 %v1492, %v1764
  %v1893 = vadd.f32 %v1493, %v1765
  %v1894 = vadd.f32 %v1494, %v1766
  %v1895 = vadd.f32 %v1495, %v1767
  %v1896 = vadd.f32 %v1496, %v1768
  %v1897 = vadd.f32 %v1497, %v1769
  %v1898 = vadd.f32 %v1498, %v1770
  %v1899 = vadd.f32 %v1499, %v1771
  %v1900 = vadd.f32 %v1500, %v1772
  %v1901 = vadd.f32 %v1501, %v1773
  %v1902 = vadd.f32 %v1502, %v1774
  %v1903 = vadd.f32 %v1503, %v1775
  %v1904 = vadd.f32 %v1504, %v1776
  %v1905 = vadd.f32 %v1505, %v1777
  %v1906 = vadd.f32 %v1506, %v1778
  %v1907 = vadd.f32 %v1507, %v1779
  %v1908 = vadd.f32 %v1508, %v1780
  %v1909 = vadd.f32 %v1509, %v1781
  %v1910 = vadd.f32 %v1510, %v1782
  %v1911 = vadd.f32 %v1511, %v1783
  %v1912 = vadd.f32 %v1512, %v1784
  %v1913 = vadd.f32 %v1513, %v1785
  %v1914 = vadd.f32 %v1514, %v1786
  %v1915 = vadd.f32 %v1515, %v1787
  %v1916 = vadd.f32 %v1516, %v1788
  %v1917 = vadd.f32 %v1517, %v1789
  %v1918 = vadd.f32 %v1518, %v1790
  %v1919 = vadd.f32 %v1519, %v1791
  %v1920 = vadd.f32 %v1520, %v1792
  %v1921 = vadd.f32 %v1521, %v1793
  %v1922 = vadd.f32 %v1522, %v1794
  %v1923 = vadd.f32 %v1523, %v1795
  %v1924 = vadd.f32 %v1524, %v1796
  %v1925 = vadd.f32 %v1525, %v1797
  %v1926 = vadd.f32 %v1526, %v1798
  %v1927 = vadd.f32 %v1527, %v1799
  %v1928 = vadd.f32 %v1528, %v1800
  %v1929 = vadd.f32 %v1529, %v1801
  %v1930 = vadd.f32 %v1530, %v1802
  %v1931 = vadd.f32 %v1531, %v1803
  %v1932 = vadd.f32 %v1532, %v1804
  %v1933 = vadd.f32 %v1533, %v1805
  %v1934 = vadd.f32 %v1534, %v1806
  %v1935 = vadd.f32 %v1535, %v1807
  %v1936 = vadd.f32 %v1536, %v1808
  %v1937 = vadd.f32 %v1537, %v1809
  %v1938 = vadd.f32 %v1538, %v1810
  %v1939 = vadd.f32 %v1539, %v1811
  %v1940 = vadd.f32 %v1540, %v1812
  %v1941 = vadd.f32 %v1541, %v1813
  %v1942 = vadd.f32 %v1542, %v1814
  %v1943 = vadd.f32 %v1543, %v1815
  %v1944 = vadd.f32 %v1544, %v1816
  %v1945 = vadd.f32 %v1545, %v1817
  %v1946 = vadd.f32 %v1546, %v1818
  %v1947 = vadd.f32 %v1547, %v1819
  %v1948 = vadd.f32 %v1548, %v1820
  %v1949 = vadd.f32 %v1549, %v1821
  %v1950 = vadd.f32 %v1550, %v1822
  %1951 = vst [vmem:[%s2] sm:$0xff] %v1823
  %1952 = vst [vmem:[%s2 + $0x8] sm:$0xff] %v1824
  %1953 = vst [vmem:[%s2 + $0x10] sm:$0xff] %v1825
  %1954 = vst [vmem:[%s2 + $0x18] sm:$0xff] %v1826
  %1955 = vst [vmem:[%s2 + $0x20] sm:$0xff] %v1827
  %1956 = vst [vmem:[%s2 + $0x28] sm:$0xff] %v1828
  %1957 = vst [vmem:[%s2 + $0x30] sm:$0xff] %v1829
  %1958 = vst [vmem:[%s2 + $0x38] sm:$0xff] %v1830
  %1959 = vst [vmem:[%s2 + $0x40] sm:$0xff] %v1831
  %1960 = vst [vmem:[%s2 + $0x48] sm:$0xff] %v1832
  %1961 = vst [vmem:[%s2 + $0x50] sm:$0xff] %v1833
  %1962 = vst [vmem:[%s2 + $0x58] sm:$0xff] %v1834
  %1963 = vst [vmem:[%s2 + $0x60] sm:$0xff] %v1835
  %1964 = vst [vmem:[%s2 + $0x68] sm:$0xff] %v1836
  %1965 = vst [vmem:[%s2 + $0x70] sm:$0xff] %v1837
  %1966 = vst [vmem:[%s2 + $0x78] sm:$0xff] %v1838
  %1967 = vst [vmem:[%s2 + $0x80] sm:$0xff] %v1839
  %1968 = vst [vmem:[%s2 + $0x88] sm:$0xff] %v1840
  %1969 = vst [vmem:[%s2 + $0x90] sm:$0xff] %v1841
  %1970 = vst [vmem:[%s2 + $0x98] sm:$0xff] %v1842
  %1971 = vst [vmem:[%s2 + $0xa0] sm:$0xff] %v1843
  %1972 = vst [vmem:[%s2 + $0xa8] sm:$0xff] %v1844
  %1973 = vst [vmem:[%s2 + $0xb0] sm:$0xff] %v1845
  %1974 = vst [vmem:[%s2 + $0xb8] sm:$0xff] %v1846
  %1975 = vst [vmem:[%s2 + $0xc0] sm:$0xff] %v1847
  %1976 = vst [vmem:[%s2 + $0xc8] sm:$0xff] %v1848
  %1977 = vst [vmem:[%s2 + $0xd0] sm:$0xff] %v1849
  %1978 = vst [vmem:[%s2 + $0xd8] sm:$0xff] %v1850
  %1979 = vst [vmem:[%s2 + $0xe0] sm:$0xff] %v1851
  %1980 = vst [vmem:[%s2 + $0xe8] sm:$0xff] %v1852
  %1981 = vst [vmem:[%s2 + $0xf0] sm:$0xff] %v1853
  %1982 = vst [vmem:[%s2 + $0xf8] sm:$0xff] %v1854
  %1983 = vst [vmem:[%s2 + $0x100] sm:$0xff] %v1855
  %1984 = vst [vmem:[%s2 + $0x108] sm:$0xff] %v1856
  %1985 = vst [vmem:[%s2 + $0x110] sm:$0xff] %v1857
  %1986 = vst [vmem:[%s2 + $0x118] sm:$0xff] %v1858
  %1987 = vst [vmem:[%s2 + $0x120] sm:$0xff] %v1859
  %1988 = vst [vmem:[%s2 + $0x128] sm:$0xff] %v1860
  %1989 = vst [vmem:[%s2 + $0x130] sm:$0xff] %v1861
  %1990 = vst [vmem:[%s2 + $0x138] sm:$0xff] %v1862
  %1991 = vst [vmem:[%s2 + $0x140] sm:$0xff] %v1863
  %1992 = vst [vmem:[%s2 + $0x148] sm:$0xff] %v1864
  %1993 = vst [vmem:[%s2 + $0x150] sm:$0xff] %v1865
  %1994 = vst [vmem:[%s2 + $0x158] sm:$0xff] %v1866
  %1995 = vst [vmem:[%s2 + $0x160] sm:$0xff] %v1867
  %1996 = vst [vmem:[%s2 + $0x168] sm:$0xff] %v1868
  %1997 = vst [vmem:[%s2 + $0x170] sm:$0xff] %v1869
  %1998 = vst [vmem:[%s2 + $0x178] sm:$0xff] %v1870
  %1999 = vst [vmem:[%s2 + $0x180] sm:$0xff] %v1871
  %2000 = vst [vmem:[%s2 + $0x188] sm:$0xff] %v1872
  %2001 = vst [vmem:[%s2 + $0x190] sm:$0xff] %v1873
  %2002 = vst [vmem:[%s2 + $0x198] sm:$0xff] %v1874
  %2003 = vst [vmem:[%s2 + $0x1a0] sm:$0xff] %v1875
  %2004 = vst [vmem:[%s2 + $0x1a8] sm:$0xff] %v1876
  %2005 = vst [vmem:[%s2 + $0x1b0] sm:$0xff] %v1877
  %2006 = vst [vmem:[%s2 + $0x1b8] sm:$0xff] %v1878
  %2007 = vst [vmem:[%s2 + $0x1c0] sm:$0xff] %v1879
  %2008 = vst [vmem:[%s2 + $0x1c8] sm:$0xff] %v1880
  %2009 = vst [vmem:[%s2 + $0x1d0] sm:$0xff] %v1881
  %2010 = vst [vmem:[%s2 + $0x1d8] sm:$0xff] %v1882
  %2011 = vst [vmem:[%s2 + $0x1e0] sm:$0xff] %v1883
  %2012 = vst [vmem:[%s2 + $0x1e8] sm:$0xff] %v1884
  %2013 = vst [vmem:[%s2 + $0x1f0] sm:$0xff] %v1885
  %2014 = vst [vmem:[%s2 + $0x1f8] sm:$0xff] %v1886
  %2015 = vst [vmem:[%s2 + $0x200] sm:$0xff] %v1887
  %2016 = vst [vmem:[%s2 + $0x208] sm:$0xff] %v1888
  %2017 = vst [vmem:[%s2 + $0x210] sm:$0xff] %v1889
  %2018 = vst [vmem:[%s2 + $0x218] sm:$0xff] %v1890
  %2019 = vst [vmem:[%s2 + $0x220] sm:$0xff] %v1891
  %2020 = vst [vmem:[%s2 + $0x228] sm:$0xff] %v1892
  %2021 = vst [vmem:[%s2 + $0x230] sm:$0xff] %v1893
  %2022 = vst [vmem:[%s2 + $0x238] sm:$0xff] %v1894
  %2023 = vst [vmem:[%s2 + $0x240] sm:$0xff] %v1895
  %2024 = vst [vmem:[%s2 + $0x248] sm:$0xff] %v1896
  %2025 = vst [vmem:[%s2 + $0x250] sm:$0xff] %v1897
  %2026 = vst [vmem:[%s2 + $0x258] sm:$0xff] %v1898
  %2027 = vst [vmem:[%s2 + $0x260] sm:$0xff] %v1899
  %2028 = vst [vmem:[%s2 + $0x268] sm:$0xff] %v1900
  %2029 = vst [vmem:[%s2 + $0x270] sm:$0xff] %v1901
  %2030 = vst [vmem:[%s2 + $0x278] sm:$0xff] %v1902
  %2031 = vst [vmem:[%s2 + $0x280] sm:$0xff] %v1903
  %2032 = vst [vmem:[%s2 + $0x288] sm:$0xff] %v1904
  %2033 = vst [vmem:[%s2 + $0x290] sm:$0xff] %v1905
  %2034 = vst [vmem:[%s2 + $0x298] sm:$0xff] %v1906
  %2035 = vst [vmem:[%s2 + $0x2a0] sm:$0xff] %v1907
  %2036 = vst [vmem:[%s2 + $0x2a8] sm:$0xff] %v1908
  %2037 = vst [vmem:[%s2 + $0x2b0] sm:$0xff] %v1909
  %2038 = vst [vmem:[%s2 + $0x2b8] sm:$0xff] %v1910
  %2039 = vst [vmem:[%s2 + $0x2c0] sm:$0xff] %v1911
  %2040 = vst [vmem:[%s2 + $0x2c8] sm:$0xff] %v1912
  %2041 = vst [vmem:[%s2 + $0x2d0] sm:$0xff] %v1913
  %2042 = vst [vmem:[%s2 + $0x2d8] sm:$0xff] %v1914
  %2043 = vst [vmem:[%s2 + $0x2e0] sm:$0xff] %v1915
  %2044 = vst [vmem:[%s2 + $0x2e8] sm:$0xff] %v1916
  %2045 = vst [vmem:[%s2 + $0x2f0] sm:$0xff] %v1917
  %2046 = vst [vmem:[%s2 + $0x2f8] sm:$0xff] %v1918
  %2047 = vst [vmem:[%s2 + $0x300] sm:$0xff] %v1919
  %2048 = vst [vmem:[%s2 + $0x308] sm:$0xff] %v1920
  %2049 = vst [vmem:[%s2 + $0x310] sm:$0xff] %v1921
  %2050 = vst [vmem:[%s2 + $0x318] sm:$0xff] %v1922
  %2051 = vst [vmem:[%s2 + $0x320] sm:$0xff] %v1923
  %2052 = vst [vmem:[%s2 + $0x328] sm:$0xff] %v1924
  %2053 = vst [vmem:[%s2 + $0x330] sm:$0xff] %v1925
  %2054 = vst [vmem:[%s2 + $0x338] sm:$0xff] %v1926
  %2055 = vst [vmem:[%s2 + $0x340] sm:$0xff] %v1927
  %2056 = vst [vmem:[%s2 + $0x348] sm:$0xff] %v1928
  %2057 = vst [vmem:[%s2 + $0x350] sm:$0xff] %v1929
  %2058 = vst [vmem:[%s2 + $0x358] sm:$0xff] %v1930
  %2059 = vst [vmem:[%s2 + $0x360] sm:$0xff] %v1931
  %2060 = vst [vmem:[%s2 + $0x368] sm:$0xff] %v1932
  %2061 = vst [vmem:[%s2 + $0x370] sm:$0xff] %v1933
  %2062 = vst [vmem:[%s2 + $0x378] sm:$0xff] %v1934
  %2063 = vst [vmem:[%s2 + $0x380] sm:$0xff] %v1935
  %2064 = vst [vmem:[%s2 + $0x388] sm:$0xff] %v1936
  %2065 = vst [vmem:[%s2 + $0x390] sm:$0xff] %v1937
  %2066 = vst [vmem:[%s2 + $0x398] sm:$0xff] %v1938
  %2067 = vst [vmem:[%s2 + $0x3a0] sm:$0xff] %v1939
  %2068 = vst [vmem:[%s2 + $0x3a8] sm:$0xff] %v1940
  %2069 = vst [vmem:[%s2 + $0x3b0] sm:$0xff] %v1941
  %2070 = vst [vmem:[%s2 + $0x3b8] sm:$0xff] %v1942
  %2071 = vst [vmem:[%s2 + $0x3c0] sm:$0xff] %v1943
  %2072 = vst [vmem:[%s2 + $0x3c8] sm:$0xff] %v1944
  %2073 = vst [vmem:[%s2 + $0x3d0] sm:$0xff] %v1945
  %2074 = vst [vmem:[%s2 + $0x3d8] sm:$0xff] %v1946
  %2075 = vst [vmem:[%s2 + $0x3e0] sm:$0xff] %v1947
  %2076 = vst [vmem:[%s2 + $0x3e8] sm:$0xff] %v1948
  %2077 = vst [vmem:[%s2 + $0x3f0] sm:$0xff] %v1949
  %2078 = vst [vmem:[%s2 + $0x3f8] sm:$0xff] %v1950
  // Predicated region
  $region10: #{biased_mf_forward.1} parent=0 // pred_check
    _
  $region11: #{biased_mf_forward.1} parent=0 // pred_check_branch
    %2080 = sbr.rel (0) target = $region13
  $region12: #{biased_mf_forward.1} parent=0 // pred_region
    _
  $region13: #{biased_mf_forward.1} parent=0 // pred_fallthru
    _
  // Predicated region
  $region14: #{biased_mf_forward.1} parent=0 // pred_check
    _
  $region15: #{biased_mf_forward.1} parent=0 // pred_check_branch
    %2082 = sbr.rel (0) target = $region17
  $region16: #{biased_mf_forward.1} parent=0 // pred_region
    _
  $region17: #{biased_mf_forward.1} parent=0 // pred_fallthru
    _

</llo_original>
